<compile_context>
chip_gen: v7x
topology: tpu7x:2x2x1
jax: 0.10.0
libtpu: 0.0.40
codegen_flags: <defaults>
</compile_context>

<pallas_src>
import functools

import jax
import jax.numpy as jnp
from jax.experimental import pallas as pl
from jax.experimental.pallas import tpu as pltpu

IN_DIM, H1_DIM, H2_DIM, OUT_DIM = 784, 512, 256, 32
IN_PAD, OUT_PAD = 896, 128  # lane-dense (multiples of 128)


def encoder_kernel(x_ref, w1_ref, b1_ref, w2_ref, b2_ref, w3_ref, b3_ref, mu_ref):
    # x tile: (TB, 896) bf16; weights bf16; biases fp32; accumulate in fp32 on the MXU.
    x = x_ref[...]

    h1 = jnp.tanh(
        jnp.dot(x, w1_ref[...], preferred_element_type=jnp.float32) + b1_ref[...]
    )
    # TODO(synk): nn.Dropout(p=0.5) train-mode is stochastic; eval-mode identity here.
    # If train-mode is needed, mask h1 in-kernel with pltpu.prng_seed + prng_random_bits.

    h2 = jnp.tanh(
        jnp.dot(h1.astype(jnp.bfloat16), w2_ref[...],
                preferred_element_type=jnp.float32) + b2_ref[...]
    )

    mu_ref[...] = (
        jnp.dot(h2.astype(jnp.bfloat16), w3_ref[...],
                preferred_element_type=jnp.float32) + b3_ref[...]
    )


def _round_up(n, m):
    return ((n + m - 1) // m) * m


def prepare_params(params):
    """Pad to lane-dense shapes and cast matmul operands to bf16 (biases stay fp32)."""
    w1, b1, w2, b2, w3, b3 = params
    w1p = (jnp.zeros((IN_PAD, H1_DIM), jnp.float32)
           .at[:IN_DIM, :].set(w1).astype(jnp.bfloat16))
    w3p = (jnp.zeros((H2_DIM, OUT_PAD), jnp.float32)
           .at[:, :OUT_DIM].set(w3).astype(jnp.bfloat16))
    b3p = jnp.zeros((1, OUT_PAD), jnp.float32).at[:, :OUT_DIM].set(b3)
    return (w1p, b1, w2.astype(jnp.bfloat16), b2, w3p, b3p)


@functools.partial(jax.jit, static_argnames=("block_b",))
def encoder_forward(x, prepped, *, block_b=256):
    w1, b1, w2, b2, w3, b3 = prepped
    B = x.shape[0]

    tb = min(block_b, _round_up(B, 8))      # batch tile (multiple of 8 sublanes)
    b_pad = _round_up(B, tb)

    # Pad batch + feature dims and cast the activation operand to bf16.
    xp = jnp.zeros((b_pad, IN_PAD), jnp.float32)
    xp = xp.at[:B, :IN_DIM].set(x).astype(jnp.bfloat16)

    grid = (b_pad // tb,)

    in_specs = [
        pl.BlockSpec((tb, IN_PAD), lambda i: (i, 0)),       # x: blocked on batch
        pl.BlockSpec((IN_PAD, H1_DIM), lambda i: (0, 0)),   # W1: resident
        pl.BlockSpec((1, H1_DIM), lambda i: (0, 0)),        # b1: resident
        pl.BlockSpec((H1_DIM, H2_DIM), lambda i: (0, 0)),   # W2: resident
        pl.BlockSpec((1, H2_DIM), lambda i: (0, 0)),        # b2: resident
        pl.BlockSpec((H2_DIM, OUT_PAD), lambda i: (0, 0)),  # W3 (padded): resident
        pl.BlockSpec((1, OUT_PAD), lambda i: (0, 0)),       # b3 (padded): resident
    ]
    out_specs = pl.BlockSpec((tb, OUT_PAD), lambda i: (i, 0))

    flops = 2 * b_pad * (IN_PAD * H1_DIM + H1_DIM * H2_DIM + H2_DIM * OUT_PAD)
    bytes_accessed = (
        xp.size * 2                                   # bf16 input
        + (w1.size + w2.size + w3.size) * 2           # bf16 weights
        + (b1.size + b2.size + b3.size) * 4           # fp32 biases
        + b_pad * OUT_PAD * 4                         # fp32 output
    )

    mu_pad = pl.pallas_call(
        encoder_kernel,
        out_shape=jax.ShapeDtypeStruct((b_pad, OUT_PAD), jnp.float32),
        grid=grid,
        in_specs=in_specs,
        out_specs=out_specs,
        compiler_params=pltpu.CompilerParams(
            dimension_semantics=("parallel",),
            vmem_limit_bytes=32 * 1024 * 1024,
        ),
        cost_estimate=pl.CostEstimate(
            flops=flops,
            transcendentals=b_pad * (H1_DIM + H2_DIM),
            bytes_accessed=bytes_accessed,
        ),
    )(xp, w1, b1, w2, b2, w3, b3)

    mu = mu_pad[:B, :OUT_DIM]
    # Reference module applies the same L3 layer twice, so sigma == mu exactly.
    return mu, mu


def init_params(key):
    """Deterministic PyTorch-Linear-style init: U(-1/sqrt(fan_in), 1/sqrt(fan_in))."""
    dims = [(IN_DIM, H1_DIM), (H1_DIM, H2_DIM), (H2_DIM, OUT_DIM)]
    params = []
    for fan_in, fan_out in dims:
        kw, kb, key = jax.random.split(key, 3)
        bound = 1.0 / jnp.sqrt(jnp.float32(fan_in))
        w = jax.random.uniform(kw, (fan_in, fan_out), jnp.float32, -bound, bound)
        b = jax.random.uniform(kb, (1, fan_out), jnp.float32, -bound, bound)
        params.extend([w, b])
    return tuple(params)


def reference_forward(x, params):
    """Pure-JAX reference with the same bf16-operand / fp32-accumulate numerics."""
    w1, b1, w2, b2, w3, b3 = params
    xb = x.astype(jnp.bfloat16)
    h1 = jnp.tanh(jnp.dot(xb, w1.astype(jnp.bfloat16),
                          preferred_element_type=jnp.float32) + b1)
    h2 = jnp.tanh(jnp.dot(h1.astype(jnp.bfloat16), w2.astype(jnp.bfloat16),
                          preferred_element_type=jnp.float32) + b2)
    z = jnp.dot(h2.astype(jnp.bfloat16), w3.astype(jnp.bfloat16),
                preferred_element_type=jnp.float32) + b3
    return z, z


if __name__ == "__main__":
    key = jax.random.PRNGKey(0)
    kx, kp = jax.random.split(key)

    B = 8
    x = jax.random.normal(kx, (B, IN_DIM), dtype=jnp.float32)
    params = init_params(kp)
    prepped = prepare_params(params)

    mu, sigma = encoder_forward(x, prepped)
    jax.block_until_ready((mu, sigma))

    mu_ref, sigma_ref = reference_forward(x, params)
    assert mu.shape == (B, OUT_DIM) and sigma.shape == (B, OUT_DIM)
    assert jnp.allclose(mu, mu_ref, atol=2e-3, rtol=2e-3), \
        float(jnp.max(jnp.abs(mu - mu_ref)))
    assert jnp.allclose(sigma, sigma_ref, atol=2e-3, rtol=2e-3)
    assert jnp.array_equal(mu, sigma)

    print("KERNEL_OK")
</pallas_src>

<mosaic_0001>
module attributes {stable_mosaic.version = 11 : i64} {
  func.func @encoder_kernel(%arg0: i32, %arg1: memref<8x896xbf16, #tpu.memory_space<vmem>>, %arg2: memref<896x512xbf16, #tpu.memory_space<vmem>>, %arg3: memref<1x512xf32, #tpu.memory_space<vmem>>, %arg4: memref<512x256xbf16, #tpu.memory_space<vmem>>, %arg5: memref<1x256xf32, #tpu.memory_space<vmem>>, %arg6: memref<256x128xbf16, #tpu.memory_space<vmem>>, %arg7: memref<1x128xf32, #tpu.memory_space<vmem>>, %arg8: memref<8x128xf32, #tpu.memory_space<vmem>>) attributes {dimension_semantics = [#tpu.dimension_semantics<parallel>], iteration_bounds = array<i64: 1>, scalar_prefetch = 0 : i64, scratch_operands = 0 : i64, tpu.core_type = #tpu.core_type<tc>, window_params = [{transform_indices = @transform_0, window_bounds = array<i64: 8, 896>}, {pipeline_mode = #tpu.pipeline_mode<synchronous>, transform_indices = @transform_1, window_bounds = array<i64: 896, 512>}, {pipeline_mode = #tpu.pipeline_mode<synchronous>, transform_indices = @transform_2, window_bounds = array<i64: 1, 512>}, {pipeline_mode = #tpu.pipeline_mode<synchronous>, transform_indices = @transform_3, window_bounds = array<i64: 512, 256>}, {pipeline_mode = #tpu.pipeline_mode<synchronous>, transform_indices = @transform_4, window_bounds = array<i64: 1, 256>}, {pipeline_mode = #tpu.pipeline_mode<synchronous>, transform_indices = @transform_5, window_bounds = array<i64: 256, 128>}, {pipeline_mode = #tpu.pipeline_mode<synchronous>, transform_indices = @transform_6, window_bounds = array<i64: 1, 128>}, {transform_indices = @transform_7, window_bounds = array<i64: 8, 128>}]} {
    %c0 = arith.constant 0 : index
    %c0_0 = arith.constant 0 : index
    %0 = vector.load %arg1[%c0, %c0_0] : memref<8x896xbf16, #tpu.memory_space<vmem>>, vector<8x896xbf16>
    %c0_1 = arith.constant 0 : index
    %c0_2 = arith.constant 0 : index
    %1 = vector.load %arg2[%c0_1, %c0_2] : memref<896x512xbf16, #tpu.memory_space<vmem>>, vector<896x512xbf16>
    %cst = arith.constant dense<0.000000e+00> : vector<8x512xf32>
    %2 = tpu.matmul %0, %1, %cst {dimension_numbers = #tpu.dot_dimension_numbers<[1], [0], [0], [1], [0, 0, 1, 1], [], []>} : vector<8x896xbf16>, vector<896x512xbf16>, vector<8x512xf32> -> vector<8x512xf32>
    %c0_3 = arith.constant 0 : index
    %c0_4 = arith.constant 0 : index
    %3 = vector.load %arg3[%c0_3, %c0_4] : memref<1x512xf32, #tpu.memory_space<vmem>>, vector<1x512xf32>
    %4 = vector.broadcast %3 : vector<1x512xf32> to vector<8x512xf32>
    %5 = arith.addf %2, %4 : vector<8x512xf32>
    %6 = math.tanh %5 : vector<8x512xf32>
    %7 = arith.truncf %6 : vector<8x512xf32> to vector<8x512xbf16>
    %c0_5 = arith.constant 0 : index
    %c0_6 = arith.constant 0 : index
    %8 = vector.load %arg4[%c0_5, %c0_6] : memref<512x256xbf16, #tpu.memory_space<vmem>>, vector<512x256xbf16>
    %cst_7 = arith.constant dense<0.000000e+00> : vector<8x256xf32>
    %9 = tpu.matmul %7, %8, %cst_7 {dimension_numbers = #tpu.dot_dimension_numbers<[1], [0], [0], [1], [0, 0, 1, 1], [], []>} : vector<8x512xbf16>, vector<512x256xbf16>, vector<8x256xf32> -> vector<8x256xf32>
    %c0_8 = arith.constant 0 : index
    %c0_9 = arith.constant 0 : index
    %10 = vector.load %arg5[%c0_8, %c0_9] : memref<1x256xf32, #tpu.memory_space<vmem>>, vector<1x256xf32>
    %11 = vector.broadcast %10 : vector<1x256xf32> to vector<8x256xf32>
    %12 = arith.addf %9, %11 : vector<8x256xf32>
    %13 = math.tanh %12 : vector<8x256xf32>
    %14 = arith.truncf %13 : vector<8x256xf32> to vector<8x256xbf16>
    %c0_10 = arith.constant 0 : index
    %c0_11 = arith.constant 0 : index
    %15 = vector.load %arg6[%c0_10, %c0_11] : memref<256x128xbf16, #tpu.memory_space<vmem>>, vector<256x128xbf16>
    %cst_12 = arith.constant dense<0.000000e+00> : vector<8x128xf32>
    %16 = tpu.matmul %14, %15, %cst_12 {dimension_numbers = #tpu.dot_dimension_numbers<[1], [0], [0], [1], [0, 0, 1, 1], [], []>} : vector<8x256xbf16>, vector<256x128xbf16>, vector<8x128xf32> -> vector<8x128xf32>
    %c0_13 = arith.constant 0 : index
    %c0_14 = arith.constant 0 : index
    %17 = vector.load %arg7[%c0_13, %c0_14] : memref<1x128xf32, #tpu.memory_space<vmem>>, vector<1x128xf32>
    %18 = vector.broadcast %17 : vector<1x128xf32> to vector<8x128xf32>
    %19 = arith.addf %16, %18 : vector<8x128xf32>
    %c0_15 = arith.constant 0 : index
    %c0_16 = arith.constant 0 : index
    %20 = vector.load %arg8[%c0_15, %c0_16] : memref<8x128xf32, #tpu.memory_space<vmem>>, vector<8x128xf32>
    tpu.vector_store %arg8[%c0_15, %c0_16], %19 {strides = array<i32>} : memref<8x128xf32, #tpu.memory_space<vmem>>, vector<8x128xf32>,
    return
  }
  func.func @transform_0(%arg0: i32) -> (i32, i32) {
    %c0_i32 = arith.constant 0 : i32
    %c0_i32_0 = arith.constant 0 : i32
    return %arg0, %c0_i32 : i32, i32
  }
  func.func @transform_1(%arg0: i32) -> (i32, i32) {
    %c0_i32 = arith.constant 0 : i32
    %c0_i32_0 = arith.constant 0 : i32
    %c0_i32_1 = arith.constant 0 : i32
    return %c0_i32, %c0_i32_0 : i32, i32
  }
  func.func @transform_2(%arg0: i32) -> (i32, i32) {
    %c0_i32 = arith.constant 0 : i32
    %c0_i32_0 = arith.constant 0 : i32
    %c0_i32_1 = arith.constant 0 : i32
    return %c0_i32, %c0_i32_0 : i32, i32
  }
  func.func @transform_3(%arg0: i32) -> (i32, i32) {
    %c0_i32 = arith.constant 0 : i32
    %c0_i32_0 = arith.constant 0 : i32
    %c0_i32_1 = arith.constant 0 : i32
    return %c0_i32, %c0_i32_0 : i32, i32
  }
  func.func @transform_4(%arg0: i32) -> (i32, i32) {
    %c0_i32 = arith.constant 0 : i32
    %c0_i32_0 = arith.constant 0 : i32
    %c0_i32_1 = arith.constant 0 : i32
    return %c0_i32, %c0_i32_0 : i32, i32
  }
  func.func @transform_5(%arg0: i32) -> (i32, i32) {
    %c0_i32 = arith.constant 0 : i32
    %c0_i32_0 = arith.constant 0 : i32
    %c0_i32_1 = arith.constant 0 : i32
    return %c0_i32, %c0_i32_0 : i32, i32
  }
  func.func @transform_6(%arg0: i32) -> (i32, i32) {
    %c0_i32 = arith.constant 0 : i32
    %c0_i32_0 = arith.constant 0 : i32
    %c0_i32_1 = arith.constant 0 : i32
    return %c0_i32, %c0_i32_0 : i32, i32
  }
  func.func @transform_7(%arg0: i32) -> (i32, i32) {
    %c0_i32 = arith.constant 0 : i32
    %c0_i32_0 = arith.constant 0 : i32
    return %arg0, %c0_i32 : i32, i32
  }
}

</mosaic_0001>

<llo_original>
// kernel: encoder_forward.1
$region0: #{encoder_forward.1}
  #allocation0 [shape = 'u32[]', space=smem, size = 0x4, offset = 0x4, fixed_abs, tag = 'smem constant byte address 0x4 - core index']
  #allocation1 [shape = 'u32[144,128]{1,0:T(1,128)}', space=vmem, size = 0x12000, scoped, tag = 'internal scratch']
  %s0 = inlined_call_operand.vmem [shape: bf16[8,896], index: 0, kind: input, shape index: {}]
  %s1 = inlined_call_operand.hbm [shape: bf16[896,512], index: 1, kind: input, shape index: {}]
  %s2 = inlined_call_operand.vmem [shape: f32[1,512], index: 2, kind: input, shape index: {}]
  %s3 = inlined_call_operand.hbm [shape: bf16[512,256], index: 3, kind: input, shape index: {}]
  %s4 = inlined_call_operand.vmem [shape: f32[1,256], index: 4, kind: input, shape index: {}]
  %s5 = inlined_call_operand.vmem [shape: bf16[256,128], index: 5, kind: input, shape index: {}]
  %s6 = inlined_call_operand.vmem [shape: f32[1,128], index: 6, kind: input, shape index: {}]
  %s7 = inlined_call_operand.vmem [shape: f32[8,128], index: 7, kind: output, shape index: {}]
  %s8 = sld [smem:[#allocation0]]
  $region46: #{encoder_forward.1} parent=0
    _
  %s10 = ssub.s32 1, %s8
  %s11 = scalar_select 0, %s10, %s8
  $region1: #{encoder_forward.1} parent=0
    #allocation2 [shape = 'u8[917504]{0}', space=vmem, size = 0xe0000, scoped, tag = 'input window, operand 1, single buffered']
    #allocation3 [shape = 's32[1]{0}', space=sflag, size = 0x4, scoped, tag = 'scoped memory for encoder_forward.1']
    #allocation4 [shape = 'u8[262144]{0}', space=vmem, size = 0x40000, scoped, tag = 'input window, operand 3, single buffered']
    #allocation5 [shape = 's32[1]{0}', space=sflag, size = 0x4, scoped, tag = 'scoped memory for encoder_forward.1']
    %12 = vsyncpa [#allocation3], 0
    %13 = vsyncpa [#allocation5], 0
    // Predicated region
    $region2: #{encoder_forward.1} parent=1 // pred_check
      _
    $region3: #{encoder_forward.1} parent=1 // pred_check_branch
      %15 = sbr.rel (0) target = $region5
    $region4: #{encoder_forward.1} parent=1 // pred_region
      _
    $region5: #{encoder_forward.1} parent=1 // pred_fallthru
      _
    // Predicated region
    $region6: #{encoder_forward.1} parent=1 // pred_check
      _
    $region7: #{encoder_forward.1} parent=1 // pred_check_branch
      %17 = sbr.rel (0) target = $region9
    $region8: #{encoder_forward.1} parent=1 // pred_region
      %s19 = ssub.s32 28672, 28672
      %20 = vsyncadd [#allocation3], %s19
      %s21 = sshll.u32 [#allocation2], 4
      %s22 = int_to_ptr.vmem [resolvable:$true] %s21
      %27 = dma.hbm_to_vmem [thread:$0]  %s1, 28672, %s22, [#allocation3], 256, 256, 16
    $region9: #{encoder_forward.1} parent=1 // pred_fallthru
      _
    // Predicated region
    $region10: #{encoder_forward.1} parent=1 // pred_check
      _
    $region11: #{encoder_forward.1} parent=1 // pred_check_branch
      %29 = sbr.rel (0) target = $region13
    $region12: #{encoder_forward.1} parent=1 // pred_region
      _
    $region13: #{encoder_forward.1} parent=1 // pred_fallthru
      _
    // Predicated region
    $region14: #{encoder_forward.1} parent=1 // pred_check
      _
    $region15: #{encoder_forward.1} parent=1 // pred_check_branch
      %31 = sbr.rel (0) target = $region17
    $region16: #{encoder_forward.1} parent=1 // pred_region
      %s33 = ssub.s32 8192, 8192
      %34 = vsyncadd [#allocation5], %s33
      %s35 = sshll.u32 [#allocation4], 4
      %s36 = int_to_ptr.vmem [resolvable:$true] %s35
      %41 = dma.hbm_to_vmem [thread:$0]  %s3, 8192, %s36, [#allocation5], 128, 128, 8
    $region17: #{encoder_forward.1} parent=1 // pred_fallthru
      _
    // Predicated region
    $region18: #{encoder_forward.1} parent=1 // pred_check
      _
    $region19: #{encoder_forward.1} parent=1 // pred_check_branch
      %43 = sbr.rel (0) target = $region21
    $region20: #{encoder_forward.1} parent=1 // pred_region
      _
    $region21: #{encoder_forward.1} parent=1 // pred_fallthru
      _
    // Predicated region
    $region22: #{encoder_forward.1} parent=1 // pred_check
      _
    $region23: #{encoder_forward.1} parent=1 // pred_check_branch
      %45 = sbr.rel (0) target = $region25
    $region24: #{encoder_forward.1} parent=1 // pred_region
      _
    $region25: #{encoder_forward.1} parent=1 // pred_fallthru
      _
    // Predicated region
    $region26: #{encoder_forward.1} parent=1 // pred_check
      _
    $region27: #{encoder_forward.1} parent=1 // pred_check_branch
      %47 = sbr.rel (0) target = $region29
    $region28: #{encoder_forward.1} parent=1 // pred_region
      _
    $region29: #{encoder_forward.1} parent=1 // pred_fallthru
      _
    // Predicated region
    $region30: #{encoder_forward.1} parent=1 // pred_check
      _
    $region31: #{encoder_forward.1} parent=1 // pred_check_branch
      %49 = sbr.rel (0) target = $region33
    $region32: #{encoder_forward.1} parent=1 // pred_region
      %50 = dma.done [#allocation3], 28672
    $region33: #{encoder_forward.1} parent=1 // pred_fallthru
      _
    // Predicated region
    $region34: #{encoder_forward.1} parent=1 // pred_check
      _
    $region35: #{encoder_forward.1} parent=1 // pred_check_branch
      %52 = sbr.rel (0) target = $region37
    $region36: #{encoder_forward.1} parent=1 // pred_region
      %53 = dma.done [#allocation5], 8192
    $region37: #{encoder_forward.1} parent=1 // pred_fallthru
      _
    %v55 = vld [vmem:[%s0] sm:$0xff]
    %v56 = vld [vmem:[%s0 + $0x8] sm:$0xff]
    %v57 = vld [vmem:[%s0 + $0x10] sm:$0xff]
    %v58 = vld [vmem:[%s0 + $0x18] sm:$0xf]
    %v59 = vld [vmem:[#allocation2] sm:$0xff]
    %v60 = vld [vmem:[#allocation2 + $0x8] sm:$0xff]
    %v61 = vld [vmem:[#allocation2 + $0x10] sm:$0xff]
    %v62 = vld [vmem:[#allocation2 + $0x18] sm:$0xff]
    %v63 = vld [vmem:[#allocation2 + $0x20] sm:$0xff]
    %v64 = vld [vmem:[#allocation2 + $0x28] sm:$0xff]
    %v65 = vld [vmem:[#allocation2 + $0x30] sm:$0xff]
    %v66 = vld [vmem:[#allocation2 + $0x38] sm:$0xff]
    %v67 = vld [vmem:[#allocation2 + $0x40] sm:$0xff]
    %v68 = vld [vmem:[#allocation2 + $0x48] sm:$0xff]
    %v69 = vld [vmem:[#allocation2 + $0x50] sm:$0xff]
    %v70 = vld [vmem:[#allocation2 + $0x58] sm:$0xff]
    %v71 = vld [vmem:[#allocation2 + $0x60] sm:$0xff]
    %v72 = vld [vmem:[#allocation2 + $0x68] sm:$0xff]
    %v73 = vld [vmem:[#allocation2 + $0x70] sm:$0xff]
    %v74 = vld [vmem:[#allocation2 + $0x78] sm:$0xff]
    %v75 = vld [vmem:[#allocation2 + $0x80] sm:$0xff]
    %v76 = vld [vmem:[#allocation2 + $0x88] sm:$0xff]
    %v77 = vld [vmem:[#allocation2 + $0x90] sm:$0xff]
    %v78 = vld [vmem:[#allocation2 + $0x98] sm:$0xff]
    %v79 = vld [vmem:[#allocation2 + $0xa0] sm:$0xff]
    %v80 = vld [vmem:[#allocation2 + $0xa8] sm:$0xff]
    %v81 = vld [vmem:[#allocation2 + $0xb0] sm:$0xff]
    %v82 = vld [vmem:[#allocation2 + $0xb8] sm:$0xff]
    %v83 = vld [vmem:[#allocation2 + $0xc0] sm:$0xff]
    %v84 = vld [vmem:[#allocation2 + $0xc8] sm:$0xff]
    %v85 = vld [vmem:[#allocation2 + $0xd0] sm:$0xff]
    %v86 = vld [vmem:[#allocation2 + $0xd8] sm:$0xff]
    %v87 = vld [vmem:[#allocation2 + $0xe0] sm:$0xff]
    %v88 = vld [vmem:[#allocation2 + $0xe8] sm:$0xff]
    %v89 = vld [vmem:[#allocation2 + $0xf0] sm:$0xff]
    %v90 = vld [vmem:[#allocation2 + $0xf8] sm:$0xff]
    %v91 = vld [vmem:[#allocation2 + $0x100] sm:$0xff]
    %v92 = vld [vmem:[#allocation2 + $0x108] sm:$0xff]
    %v93 = vld [vmem:[#allocation2 + $0x110] sm:$0xff]
    %v94 = vld [vmem:[#allocation2 + $0x118] sm:$0xff]
    %v95 = vld [vmem:[#allocation2 + $0x120] sm:$0xff]
    %v96 = vld [vmem:[#allocation2 + $0x128] sm:$0xff]
    %v97 = vld [vmem:[#allocation2 + $0x130] sm:$0xff]
    %v98 = vld [vmem:[#allocation2 + $0x138] sm:$0xff]
    %v99 = vld [vmem:[#allocation2 + $0x140] sm:$0xff]
    %v100 = vld [vmem:[#allocation2 + $0x148] sm:$0xff]
    %v101 = vld [vmem:[#allocation2 + $0x150] sm:$0xff]
    %v102 = vld [vmem:[#allocation2 + $0x158] sm:$0xff]
    %v103 = vld [vmem:[#allocation2 + $0x160] sm:$0xff]
    %v104 = vld [vmem:[#allocation2 + $0x168] sm:$0xff]
    %v105 = vld [vmem:[#allocation2 + $0x170] sm:$0xff]
    %v106 = vld [vmem:[#allocation2 + $0x178] sm:$0xff]
    %v107 = vld [vmem:[#allocation2 + $0x180] sm:$0xff]
    %v108 = vld [vmem:[#allocation2 + $0x188] sm:$0xff]
    %v109 = vld [vmem:[#allocation2 + $0x190] sm:$0xff]
    %v110 = vld [vmem:[#allocation2 + $0x198] sm:$0xff]
    %v111 = vld [vmem:[#allocation2 + $0x1a0] sm:$0xff]
    %v112 = vld [vmem:[#allocation2 + $0x1a8] sm:$0xff]
    %v113 = vld [vmem:[#allocation2 + $0x1b0] sm:$0xff]
    %v114 = vld [vmem:[#allocation2 + $0x1b8] sm:$0xff]
    %v115 = vld [vmem:[#allocation2 + $0x1c0] sm:$0xff]
    %v116 = vld [vmem:[#allocation2 + $0x1c8] sm:$0xff]
    %v117 = vld [vmem:[#allocation2 + $0x1d0] sm:$0xff]
    %v118 = vld [vmem:[#allocation2 + $0x1d8] sm:$0xff]
    %v119 = vld [vmem:[#allocation2 + $0x1e0] sm:$0xff]
    %v120 = vld [vmem:[#allocation2 + $0x1e8] sm:$0xff]
    %v121 = vld [vmem:[#allocation2 + $0x1f0] sm:$0xff]
    %v122 = vld [vmem:[#allocation2 + $0x1f8] sm:$0xff]
    %v123 = vld [vmem:[#allocation2 + $0x200] sm:$0xff]
    %v124 = vld [vmem:[#allocation2 + $0x208] sm:$0xff]
    %v125 = vld [vmem:[#allocation2 + $0x210] sm:$0xff]
    %v126 = vld [vmem:[#allocation2 + $0x218] sm:$0xff]
    %v127 = vld [vmem:[#allocation2 + $0x220] sm:$0xff]
    %v128 = vld [vmem:[#allocation2 + $0x228] sm:$0xff]
    %v129 = vld [vmem:[#allocation2 + $0x230] sm:$0xff]
    %v130 = vld [vmem:[#allocation2 + $0x238] sm:$0xff]
    %v131 = vld [vmem:[#allocation2 + $0x240] sm:$0xff]
    %v132 = vld [vmem:[#allocation2 + $0x248] sm:$0xff]
    %v133 = vld [vmem:[#allocation2 + $0x250] sm:$0xff]
    %v134 = vld [vmem:[#allocation2 + $0x258] sm:$0xff]
    %v135 = vld [vmem:[#allocation2 + $0x260] sm:$0xff]
    %v136 = vld [vmem:[#allocation2 + $0x268] sm:$0xff]
    %v137 = vld [vmem:[#allocation2 + $0x270] sm:$0xff]
    %v138 = vld [vmem:[#allocation2 + $0x278] sm:$0xff]
    %v139 = vld [vmem:[#allocation2 + $0x280] sm:$0xff]
    %v140 = vld [vmem:[#allocation2 + $0x288] sm:$0xff]
    %v141 = vld [vmem:[#allocation2 + $0x290] sm:$0xff]
    %v142 = vld [vmem:[#allocation2 + $0x298] sm:$0xff]
    %v143 = vld [vmem:[#allocation2 + $0x2a0] sm:$0xff]
    %v144 = vld [vmem:[#allocation2 + $0x2a8] sm:$0xff]
    %v145 = vld [vmem:[#allocation2 + $0x2b0] sm:$0xff]
    %v146 = vld [vmem:[#allocation2 + $0x2b8] sm:$0xff]
    %v147 = vld [vmem:[#allocation2 + $0x2c0] sm:$0xff]
    %v148 = vld [vmem:[#allocation2 + $0x2c8] sm:$0xff]
    %v149 = vld [vmem:[#allocation2 + $0x2d0] sm:$0xff]
    %v150 = vld [vmem:[#allocation2 + $0x2d8] sm:$0xff]
    %v151 = vld [vmem:[#allocation2 + $0x2e0] sm:$0xff]
    %v152 = vld [vmem:[#allocation2 + $0x2e8] sm:$0xff]
    %v153 = vld [vmem:[#allocation2 + $0x2f0] sm:$0xff]
    %v154 = vld [vmem:[#allocation2 + $0x2f8] sm:$0xff]
    %v155 = vld [vmem:[#allocation2 + $0x300] sm:$0xff]
    %v156 = vld [vmem:[#allocation2 + $0x308] sm:$0xff]
    %v157 = vld [vmem:[#allocation2 + $0x310] sm:$0xff]
    %v158 = vld [vmem:[#allocation2 + $0x318] sm:$0xff]
    %v159 = vld [vmem:[#allocation2 + $0x320] sm:$0xff]
    %v160 = vld [vmem:[#allocation2 + $0x328] sm:$0xff]
    %v161 = vld [vmem:[#allocation2 + $0x330] sm:$0xff]
    %v162 = vld [vmem:[#allocation2 + $0x338] sm:$0xff]
    %v163 = vld [vmem:[#allocation2 + $0x340] sm:$0xff]
    %v164 = vld [vmem:[#allocation2 + $0x348] sm:$0xff]
    %v165 = vld [vmem:[#allocation2 + $0x350] sm:$0xff]
    %v166 = vld [vmem:[#allocation2 + $0x358] sm:$0xff]
    %v167 = vld [vmem:[#allocation2 + $0x360] sm:$0xff]
    %v168 = vld [vmem:[#allocation2 + $0x368] sm:$0xff]
    %v169 = vld [vmem:[#allocation2 + $0x370] sm:$0xff]
    %v170 = vld [vmem:[#allocation2 + $0x378] sm:$0xff]
    %v171 = vld [vmem:[#allocation2 + $0x380] sm:$0xff]
    %v172 = vld [vmem:[#allocation2 + $0x388] sm:$0xff]
    %v173 = vld [vmem:[#allocation2 + $0x390] sm:$0xff]
    %v174 = vld [vmem:[#allocation2 + $0x398] sm:$0xff]
    %v175 = vld [vmem:[#allocation2 + $0x3a0] sm:$0xff]
    %v176 = vld [vmem:[#allocation2 + $0x3a8] sm:$0xff]
    %v177 = vld [vmem:[#allocation2 + $0x3b0] sm:$0xff]
    %v178 = vld [vmem:[#allocation2 + $0x3b8] sm:$0xff]
    %v179 = vld [vmem:[#allocation2 + $0x3c0] sm:$0xff]
    %v180 = vld [vmem:[#allocation2 + $0x3c8] sm:$0xff]
    %v181 = vld [vmem:[#allocation2 + $0x3d0] sm:$0xff]
    %v182 = vld [vmem:[#allocation2 + $0x3d8] sm:$0xff]
    %v183 = vld [vmem:[#allocation2 + $0x3e0] sm:$0xff]
    %v184 = vld [vmem:[#allocation2 + $0x3e8] sm:$0xff]
    %v185 = vld [vmem:[#allocation2 + $0x3f0] sm:$0xff]
    %v186 = vld [vmem:[#allocation2 + $0x3f8] sm:$0xff]
    %v187 = vld [vmem:[#allocation2 + $0x400] sm:$0xff]
    %v188 = vld [vmem:[#allocation2 + $0x408] sm:$0xff]
    %v189 = vld [vmem:[#allocation2 + $0x410] sm:$0xff]
    %v190 = vld [vmem:[#allocation2 + $0x418] sm:$0xff]
    %v191 = vld [vmem:[#allocation2 + $0x420] sm:$0xff]
    %v192 = vld [vmem:[#allocation2 + $0x428] sm:$0xff]
    %v193 = vld [vmem:[#allocation2 + $0x430] sm:$0xff]
    %v194 = vld [vmem:[#allocation2 + $0x438] sm:$0xff]
    %v195 = vld [vmem:[#allocation2 + $0x440] sm:$0xff]
    %v196 = vld [vmem:[#allocation2 + $0x448] sm:$0xff]
    %v197 = vld [vmem:[#allocation2 + $0x450] sm:$0xff]
    %v198 = vld [vmem:[#allocation2 + $0x458] sm:$0xff]
    %v199 = vld [vmem:[#allocation2 + $0x460] sm:$0xff]
    %v200 = vld [vmem:[#allocation2 + $0x468] sm:$0xff]
    %v201 = vld [vmem:[#allocation2 + $0x470] sm:$0xff]
    %v202 = vld [vmem:[#allocation2 + $0x478] sm:$0xff]
    %v203 = vld [vmem:[#allocation2 + $0x480] sm:$0xff]
    %v204 = vld [vmem:[#allocation2 + $0x488] sm:$0xff]
    %v205 = vld [vmem:[#allocation2 + $0x490] sm:$0xff]
    %v206 = vld [vmem:[#allocation2 + $0x498] sm:$0xff]
    %v207 = vld [vmem:[#allocation2 + $0x4a0] sm:$0xff]
    %v208 = vld [vmem:[#allocation2 + $0x4a8] sm:$0xff]
    %v209 = vld [vmem:[#allocation2 + $0x4b0] sm:$0xff]
    %v210 = vld [vmem:[#allocation2 + $0x4b8] sm:$0xff]
    %v211 = vld [vmem:[#allocation2 + $0x4c0] sm:$0xff]
    %v212 = vld [vmem:[#allocation2 + $0x4c8] sm:$0xff]
    %v213 = vld [vmem:[#allocation2 + $0x4d0] sm:$0xff]
    %v214 = vld [vmem:[#allocation2 + $0x4d8] sm:$0xff]
    %v215 = vld [vmem:[#allocation2 + $0x4e0] sm:$0xff]
    %v216 = vld [vmem:[#allocation2 + $0x4e8] sm:$0xff]
    %v217 = vld [vmem:[#allocation2 + $0x4f0] sm:$0xff]
    %v218 = vld [vmem:[#allocation2 + $0x4f8] sm:$0xff]
    %v219 = vld [vmem:[#allocation2 + $0x500] sm:$0xff]
    %v220 = vld [vmem:[#allocation2 + $0x508] sm:$0xff]
    %v221 = vld [vmem:[#allocation2 + $0x510] sm:$0xff]
    %v222 = vld [vmem:[#allocation2 + $0x518] sm:$0xff]
    %v223 = vld [vmem:[#allocation2 + $0x520] sm:$0xff]
    %v224 = vld [vmem:[#allocation2 + $0x528] sm:$0xff]
    %v225 = vld [vmem:[#allocation2 + $0x530] sm:$0xff]
    %v226 = vld [vmem:[#allocation2 + $0x538] sm:$0xff]
    %v227 = vld [vmem:[#allocation2 + $0x540] sm:$0xff]
    %v228 = vld [vmem:[#allocation2 + $0x548] sm:$0xff]
    %v229 = vld [vmem:[#allocation2 + $0x550] sm:$0xff]
    %v230 = vld [vmem:[#allocation2 + $0x558] sm:$0xff]
    %v231 = vld [vmem:[#allocation2 + $0x560] sm:$0xff]
    %v232 = vld [vmem:[#allocation2 + $0x568] sm:$0xff]
    %v233 = vld [vmem:[#allocation2 + $0x570] sm:$0xff]
    %v234 = vld [vmem:[#allocation2 + $0x578] sm:$0xff]
    %v235 = vld [vmem:[#allocation2 + $0x580] sm:$0xff]
    %v236 = vld [vmem:[#allocation2 + $0x588] sm:$0xff]
    %v237 = vld [vmem:[#allocation2 + $0x590] sm:$0xff]
    %v238 = vld [vmem:[#allocation2 + $0x598] sm:$0xff]
    %v239 = vld [vmem:[#allocation2 + $0x5a0] sm:$0xff]
    %v240 = vld [vmem:[#allocation2 + $0x5a8] sm:$0xff]
    %v241 = vld [vmem:[#allocation2 + $0x5b0] sm:$0xff]
    %v242 = vld [vmem:[#allocation2 + $0x5b8] sm:$0xff]
    %v243 = vld [vmem:[#allocation2 + $0x5c0] sm:$0xff]
    %v244 = vld [vmem:[#allocation2 + $0x5c8] sm:$0xff]
    %v245 = vld [vmem:[#allocation2 + $0x5d0] sm:$0xff]
    %v246 = vld [vmem:[#allocation2 + $0x5d8] sm:$0xff]
    %v247 = vld [vmem:[#allocation2 + $0x5e0] sm:$0xff]
    %v248 = vld [vmem:[#allocation2 + $0x5e8] sm:$0xff]
    %v249 = vld [vmem:[#allocation2 + $0x5f0] sm:$0xff]
    %v250 = vld [vmem:[#allocation2 + $0x5f8] sm:$0xff]
    %v251 = vld [vmem:[#allocation2 + $0x600] sm:$0xff]
    %v252 = vld [vmem:[#allocation2 + $0x608] sm:$0xff]
    %v253 = vld [vmem:[#allocation2 + $0x610] sm:$0xff]
    %v254 = vld [vmem:[#allocation2 + $0x618] sm:$0xff]
    %v255 = vld [vmem:[#allocation2 + $0x620] sm:$0xff]
    %v256 = vld [vmem:[#allocation2 + $0x628] sm:$0xff]
    %v257 = vld [vmem:[#allocation2 + $0x630] sm:$0xff]
    %v258 = vld [vmem:[#allocation2 + $0x638] sm:$0xff]
    %v259 = vld [vmem:[#allocation2 + $0x640] sm:$0xff]
    %v260 = vld [vmem:[#allocation2 + $0x648] sm:$0xff]
    %v261 = vld [vmem:[#allocation2 + $0x650] sm:$0xff]
    %v262 = vld [vmem:[#allocation2 + $0x658] sm:$0xff]
    %v263 = vld [vmem:[#allocation2 + $0x660] sm:$0xff]
    %v264 = vld [vmem:[#allocation2 + $0x668] sm:$0xff]
    %v265 = vld [vmem:[#allocation2 + $0x670] sm:$0xff]
    %v266 = vld [vmem:[#allocation2 + $0x678] sm:$0xff]
    %v267 = vld [vmem:[#allocation2 + $0x680] sm:$0xff]
    %v268 = vld [vmem:[#allocation2 + $0x688] sm:$0xff]
    %v269 = vld [vmem:[#allocation2 + $0x690] sm:$0xff]
    %v270 = vld [vmem:[#allocation2 + $0x698] sm:$0xff]
    %v271 = vld [vmem:[#allocation2 + $0x6a0] sm:$0xff]
    %v272 = vld [vmem:[#allocation2 + $0x6a8] sm:$0xff]
    %v273 = vld [vmem:[#allocation2 + $0x6b0] sm:$0xff]
    %v274 = vld [vmem:[#allocation2 + $0x6b8] sm:$0xff]
    %v275 = vld [vmem:[#allocation2 + $0x6c0] sm:$0xff]
    %v276 = vld [vmem:[#allocation2 + $0x6c8] sm:$0xff]
    %v277 = vld [vmem:[#allocation2 + $0x6d0] sm:$0xff]
    %v278 = vld [vmem:[#allocation2 + $0x6d8] sm:$0xff]
    %v279 = vld [vmem:[#allocation2 + $0x6e0] sm:$0xff]
    %v280 = vld [vmem:[#allocation2 + $0x6e8] sm:$0xff]
    %v281 = vld [vmem:[#allocation2 + $0x6f0] sm:$0xff]
    %v282 = vld [vmem:[#allocation2 + $0x6f8] sm:$0xff]
    %v283 = vld [vmem:[%s2] sm:$0xf]
    %v285 = vlaneseq
    %v286 = vshrl.u32 %v285, 7
    %v287 = vsub.s32 0, %v286
    %v288 = vrot.slane %v283, %v287
    %v289 = vlaneseq
    %v290 = vshrl.u32 %v289, 7
    %v291 = vsub.s32 1, %v290
    %v292 = vrot.slane %v283, %v291
    %v293 = vlaneseq
    %v294 = vshrl.u32 %v293, 7
    %v295 = vsub.s32 2, %v294
    %v296 = vrot.slane %v283, %v295
    %v297 = vlaneseq
    %v298 = vshrl.u32 %v297, 7
    %v299 = vsub.s32 3, %v298
    %v300 = vrot.slane %v283, %v299
    %v309 = vunpack.c.l.b16 %v55
    %v310 = vunpack.c.h.b16 %v55
    %v311 = vunpack.c.l.b16 %v56
    %v312 = vunpack.c.h.b16 %v56
    %v313 = vunpack.c.l.b16 %v57
    %v314 = vunpack.c.h.b16 %v57
    %v315 = vunpack.c.l.b16 %v58
    %v316 = vpack.c.b16 %v309, %v309
    %v317 = vpack.c.b16 %v310, %v310
    %v318 = vpack.c.b16 %v311, %v311
    %v319 = vpack.c.b16 %v312, %v312
    %v320 = vpack.c.b16 %v313, %v313
    %v321 = vpack.c.b16 %v314, %v314
    %v322 = vpack.c.b16 %v315, %v315
    %v554 = vunpack.c.l.b16 %v59
    %v555 = vunpack.c.h.b16 %v59
    %v556 = vunpack.c.l.b16 %v60
    %v557 = vunpack.c.h.b16 %v60
    %v558 = vunpack.c.l.b16 %v61
    %v559 = vunpack.c.h.b16 %v61
    %v560 = vunpack.c.l.b16 %v62
    %v561 = vunpack.c.h.b16 %v62
    %v562 = vunpack.c.l.b16 %v63
    %v563 = vunpack.c.h.b16 %v63
    %v564 = vunpack.c.l.b16 %v64
    %v565 = vunpack.c.h.b16 %v64
    %v566 = vunpack.c.l.b16 %v65
    %v567 = vunpack.c.h.b16 %v65
    %v568 = vunpack.c.l.b16 %v66
    %v569 = vunpack.c.h.b16 %v66
    %v570 = vunpack.c.l.b16 %v67
    %v571 = vunpack.c.h.b16 %v67
    %v572 = vunpack.c.l.b16 %v68
    %v573 = vunpack.c.h.b16 %v68
    %v574 = vunpack.c.l.b16 %v69
    %v575 = vunpack.c.h.b16 %v69
    %v576 = vunpack.c.l.b16 %v70
    %v577 = vunpack.c.h.b16 %v70
    %v578 = vunpack.c.l.b16 %v71
    %v579 = vunpack.c.h.b16 %v71
    %v580 = vunpack.c.l.b16 %v72
    %v581 = vunpack.c.h.b16 %v72
    %v582 = vunpack.c.l.b16 %v73
    %v583 = vunpack.c.h.b16 %v73
    %v584 = vunpack.c.l.b16 %v74
    %v585 = vunpack.c.h.b16 %v74
    %v586 = vunpack.c.l.b16 %v75
    %v587 = vunpack.c.h.b16 %v75
    %v588 = vunpack.c.l.b16 %v76
    %v589 = vunpack.c.h.b16 %v76
    %v590 = vunpack.c.l.b16 %v77
    %v591 = vunpack.c.h.b16 %v77
    %v592 = vunpack.c.l.b16 %v78
    %v593 = vunpack.c.h.b16 %v78
    %v594 = vunpack.c.l.b16 %v79
    %v595 = vunpack.c.h.b16 %v79
    %v596 = vunpack.c.l.b16 %v80
    %v597 = vunpack.c.h.b16 %v80
    %v598 = vunpack.c.l.b16 %v81
    %v599 = vunpack.c.h.b16 %v81
    %v600 = vunpack.c.l.b16 %v82
    %v601 = vunpack.c.h.b16 %v82
    %v602 = vunpack.c.l.b16 %v83
    %v603 = vunpack.c.h.b16 %v83
    %v604 = vunpack.c.l.b16 %v84
    %v605 = vunpack.c.h.b16 %v84
    %v606 = vunpack.c.l.b16 %v85
    %v607 = vunpack.c.h.b16 %v85
    %v608 = vunpack.c.l.b16 %v86
    %v609 = vunpack.c.h.b16 %v86
    %v610 = vunpack.c.l.b16 %v87
    %v611 = vunpack.c.h.b16 %v87
    %v612 = vunpack.c.l.b16 %v88
    %v613 = vunpack.c.h.b16 %v88
    %v614 = vunpack.c.l.b16 %v89
    %v615 = vunpack.c.h.b16 %v89
    %v616 = vunpack.c.l.b16 %v90
    %v617 = vunpack.c.h.b16 %v90
    %v618 = vunpack.c.l.b16 %v91
    %v619 = vunpack.c.h.b16 %v91
    %v620 = vunpack.c.l.b16 %v92
    %v621 = vunpack.c.h.b16 %v92
    %v622 = vunpack.c.l.b16 %v93
    %v623 = vunpack.c.h.b16 %v93
    %v624 = vunpack.c.l.b16 %v94
    %v625 = vunpack.c.h.b16 %v94
    %v626 = vunpack.c.l.b16 %v95
    %v627 = vunpack.c.h.b16 %v95
    %v628 = vunpack.c.l.b16 %v96
    %v629 = vunpack.c.h.b16 %v96
    %v630 = vunpack.c.l.b16 %v97
    %v631 = vunpack.c.h.b16 %v97
    %v632 = vunpack.c.l.b16 %v98
    %v633 = vunpack.c.h.b16 %v98
    %v634 = vunpack.c.l.b16 %v99
    %v635 = vunpack.c.h.b16 %v99
    %v636 = vunpack.c.l.b16 %v100
    %v637 = vunpack.c.h.b16 %v100
    %v638 = vunpack.c.l.b16 %v101
    %v639 = vunpack.c.h.b16 %v101
    %v640 = vunpack.c.l.b16 %v102
    %v641 = vunpack.c.h.b16 %v102
    %v642 = vunpack.c.l.b16 %v103
    %v643 = vunpack.c.h.b16 %v103
    %v644 = vunpack.c.l.b16 %v104
    %v645 = vunpack.c.h.b16 %v104
    %v646 = vunpack.c.l.b16 %v105
    %v647 = vunpack.c.h.b16 %v105
    %v648 = vunpack.c.l.b16 %v106
    %v649 = vunpack.c.h.b16 %v106
    %v650 = vunpack.c.l.b16 %v107
    %v651 = vunpack.c.h.b16 %v107
    %v652 = vunpack.c.l.b16 %v108
    %v653 = vunpack.c.h.b16 %v108
    %v654 = vunpack.c.l.b16 %v109
    %v655 = vunpack.c.h.b16 %v109
    %v656 = vunpack.c.l.b16 %v110
    %v657 = vunpack.c.h.b16 %v110
    %v658 = vunpack.c.l.b16 %v111
    %v659 = vunpack.c.h.b16 %v111
    %v660 = vunpack.c.l.b16 %v112
    %v661 = vunpack.c.h.b16 %v112
    %v662 = vunpack.c.l.b16 %v113
    %v663 = vunpack.c.h.b16 %v113
    %v664 = vunpack.c.l.b16 %v114
    %v665 = vunpack.c.h.b16 %v114
    %v666 = vunpack.c.l.b16 %v115
    %v667 = vunpack.c.h.b16 %v115
    %v668 = vunpack.c.l.b16 %v116
    %v669 = vunpack.c.h.b16 %v116
    %v670 = vunpack.c.l.b16 %v117
    %v671 = vunpack.c.h.b16 %v117
    %v672 = vunpack.c.l.b16 %v118
    %v673 = vunpack.c.h.b16 %v118
    %v674 = vunpack.c.l.b16 %v119
    %v675 = vunpack.c.h.b16 %v119
    %v676 = vunpack.c.l.b16 %v120
    %v677 = vunpack.c.h.b16 %v120
    %v678 = vunpack.c.l.b16 %v121
    %v679 = vunpack.c.h.b16 %v121
    %v680 = vunpack.c.l.b16 %v122
    %v681 = vunpack.c.h.b16 %v122
    %v682 = vunpack.c.l.b16 %v123
    %v683 = vunpack.c.h.b16 %v123
    %v684 = vunpack.c.l.b16 %v124
    %v685 = vunpack.c.h.b16 %v124
    %v686 = vunpack.c.l.b16 %v125
    %v687 = vunpack.c.h.b16 %v125
    %v688 = vunpack.c.l.b16 %v126
    %v689 = vunpack.c.h.b16 %v126
    %v690 = vunpack.c.l.b16 %v127
    %v691 = vunpack.c.h.b16 %v127
    %v692 = vunpack.c.l.b16 %v128
    %v693 = vunpack.c.h.b16 %v128
    %v694 = vunpack.c.l.b16 %v129
    %v695 = vunpack.c.h.b16 %v129
    %v696 = vunpack.c.l.b16 %v130
    %v697 = vunpack.c.h.b16 %v130
    %v698 = vunpack.c.l.b16 %v131
    %v699 = vunpack.c.h.b16 %v131
    %v700 = vunpack.c.l.b16 %v132
    %v701 = vunpack.c.h.b16 %v132
    %v702 = vunpack.c.l.b16 %v133
    %v703 = vunpack.c.h.b16 %v133
    %v704 = vunpack.c.l.b16 %v134
    %v705 = vunpack.c.h.b16 %v134
    %v706 = vunpack.c.l.b16 %v135
    %v707 = vunpack.c.h.b16 %v135
    %v708 = vunpack.c.l.b16 %v136
    %v709 = vunpack.c.h.b16 %v136
    %v710 = vunpack.c.l.b16 %v137
    %v711 = vunpack.c.h.b16 %v137
    %v712 = vunpack.c.l.b16 %v138
    %v713 = vunpack.c.h.b16 %v138
    %v714 = vunpack.c.l.b16 %v139
    %v715 = vunpack.c.h.b16 %v139
    %v716 = vunpack.c.l.b16 %v140
    %v717 = vunpack.c.h.b16 %v140
    %v718 = vunpack.c.l.b16 %v141
    %v719 = vunpack.c.h.b16 %v141
    %v720 = vunpack.c.l.b16 %v142
    %v721 = vunpack.c.h.b16 %v142
    %v722 = vunpack.c.l.b16 %v143
    %v723 = vunpack.c.h.b16 %v143
    %v724 = vunpack.c.l.b16 %v144
    %v725 = vunpack.c.h.b16 %v144
    %v726 = vunpack.c.l.b16 %v145
    %v727 = vunpack.c.h.b16 %v145
    %v728 = vunpack.c.l.b16 %v146
    %v729 = vunpack.c.h.b16 %v146
    %v730 = vunpack.c.l.b16 %v147
    %v731 = vunpack.c.h.b16 %v147
    %v732 = vunpack.c.l.b16 %v148
    %v733 = vunpack.c.h.b16 %v148
    %v734 = vunpack.c.l.b16 %v149
    %v735 = vunpack.c.h.b16 %v149
    %v736 = vunpack.c.l.b16 %v150
    %v737 = vunpack.c.h.b16 %v150
    %v738 = vunpack.c.l.b16 %v151
    %v739 = vunpack.c.h.b16 %v151
    %v740 = vunpack.c.l.b16 %v152
    %v741 = vunpack.c.h.b16 %v152
    %v742 = vunpack.c.l.b16 %v153
    %v743 = vunpack.c.h.b16 %v153
    %v744 = vunpack.c.l.b16 %v154
    %v745 = vunpack.c.h.b16 %v154
    %v746 = vunpack.c.l.b16 %v155
    %v747 = vunpack.c.h.b16 %v155
    %v748 = vunpack.c.l.b16 %v156
    %v749 = vunpack.c.h.b16 %v156
    %v750 = vunpack.c.l.b16 %v157
    %v751 = vunpack.c.h.b16 %v157
    %v752 = vunpack.c.l.b16 %v158
    %v753 = vunpack.c.h.b16 %v158
    %v754 = vunpack.c.l.b16 %v159
    %v755 = vunpack.c.h.b16 %v159
    %v756 = vunpack.c.l.b16 %v160
    %v757 = vunpack.c.h.b16 %v160
    %v758 = vunpack.c.l.b16 %v161
    %v759 = vunpack.c.h.b16 %v161
    %v760 = vunpack.c.l.b16 %v162
    %v761 = vunpack.c.h.b16 %v162
    %v762 = vunpack.c.l.b16 %v163
    %v763 = vunpack.c.h.b16 %v163
    %v764 = vunpack.c.l.b16 %v164
    %v765 = vunpack.c.h.b16 %v164
    %v766 = vunpack.c.l.b16 %v165
    %v767 = vunpack.c.h.b16 %v165
    %v768 = vunpack.c.l.b16 %v166
    %v769 = vunpack.c.h.b16 %v166
    %v770 = vunpack.c.l.b16 %v167
    %v771 = vunpack.c.h.b16 %v167
    %v772 = vunpack.c.l.b16 %v168
    %v773 = vunpack.c.h.b16 %v168
    %v774 = vunpack.c.l.b16 %v169
    %v775 = vunpack.c.h.b16 %v169
    %v776 = vunpack.c.l.b16 %v170
    %v777 = vunpack.c.h.b16 %v170
    %v778 = vunpack.c.l.b16 %v171
    %v779 = vunpack.c.h.b16 %v171
    %v780 = vunpack.c.l.b16 %v172
    %v781 = vunpack.c.h.b16 %v172
    %v782 = vunpack.c.l.b16 %v173
    %v783 = vunpack.c.h.b16 %v173
    %v784 = vunpack.c.l.b16 %v174
    %v785 = vunpack.c.h.b16 %v174
    %v786 = vunpack.c.l.b16 %v175
    %v787 = vunpack.c.h.b16 %v175
    %v788 = vunpack.c.l.b16 %v176
    %v789 = vunpack.c.h.b16 %v176
    %v790 = vunpack.c.l.b16 %v177
    %v791 = vunpack.c.h.b16 %v177
    %v792 = vunpack.c.l.b16 %v178
    %v793 = vunpack.c.h.b16 %v178
    %v794 = vunpack.c.l.b16 %v179
    %v795 = vunpack.c.h.b16 %v179
    %v796 = vunpack.c.l.b16 %v180
    %v797 = vunpack.c.h.b16 %v180
    %v798 = vunpack.c.l.b16 %v181
    %v799 = vunpack.c.h.b16 %v181
    %v800 = vunpack.c.l.b16 %v182
    %v801 = vunpack.c.h.b16 %v182
    %v802 = vunpack.c.l.b16 %v183
    %v803 = vunpack.c.h.b16 %v183
    %v804 = vunpack.c.l.b16 %v184
    %v805 = vunpack.c.h.b16 %v184
    %v806 = vunpack.c.l.b16 %v185
    %v807 = vunpack.c.h.b16 %v185
    %v808 = vunpack.c.l.b16 %v186
    %v809 = vunpack.c.h.b16 %v186
    %v810 = vunpack.c.l.b16 %v187
    %v811 = vunpack.c.h.b16 %v187
    %v812 = vunpack.c.l.b16 %v188
    %v813 = vunpack.c.h.b16 %v188
    %v814 = vunpack.c.l.b16 %v189
    %v815 = vunpack.c.h.b16 %v189
    %v816 = vunpack.c.l.b16 %v190
    %v817 = vunpack.c.h.b16 %v190
    %v818 = vunpack.c.l.b16 %v191
    %v819 = vunpack.c.h.b16 %v191
    %v820 = vunpack.c.l.b16 %v192
    %v821 = vunpack.c.h.b16 %v192
    %v822 = vunpack.c.l.b16 %v193
    %v823 = vunpack.c.h.b16 %v193
    %v824 = vunpack.c.l.b16 %v194
    %v825 = vunpack.c.h.b16 %v194
    %v826 = vunpack.c.l.b16 %v195
    %v827 = vunpack.c.h.b16 %v195
    %v828 = vunpack.c.l.b16 %v196
    %v829 = vunpack.c.h.b16 %v196
    %v830 = vunpack.c.l.b16 %v197
    %v831 = vunpack.c.h.b16 %v197
    %v832 = vunpack.c.l.b16 %v198
    %v833 = vunpack.c.h.b16 %v198
    %v834 = vunpack.c.l.b16 %v199
    %v835 = vunpack.c.h.b16 %v199
    %v836 = vunpack.c.l.b16 %v200
    %v837 = vunpack.c.h.b16 %v200
    %v838 = vunpack.c.l.b16 %v201
    %v839 = vunpack.c.h.b16 %v201
    %v840 = vunpack.c.l.b16 %v202
    %v841 = vunpack.c.h.b16 %v202
    %v842 = vunpack.c.l.b16 %v203
    %v843 = vunpack.c.h.b16 %v203
    %v844 = vunpack.c.l.b16 %v204
    %v845 = vunpack.c.h.b16 %v204
    %v846 = vunpack.c.l.b16 %v205
    %v847 = vunpack.c.h.b16 %v205
    %v848 = vunpack.c.l.b16 %v206
    %v849 = vunpack.c.h.b16 %v206
    %v850 = vunpack.c.l.b16 %v207
    %v851 = vunpack.c.h.b16 %v207
    %v852 = vunpack.c.l.b16 %v208
    %v853 = vunpack.c.h.b16 %v208
    %v854 = vunpack.c.l.b16 %v209
    %v855 = vunpack.c.h.b16 %v209
    %v856 = vunpack.c.l.b16 %v210
    %v857 = vunpack.c.h.b16 %v210
    %v858 = vunpack.c.l.b16 %v211
    %v859 = vunpack.c.h.b16 %v211
    %v860 = vunpack.c.l.b16 %v212
    %v861 = vunpack.c.h.b16 %v212
    %v862 = vunpack.c.l.b16 %v213
    %v863 = vunpack.c.h.b16 %v213
    %v864 = vunpack.c.l.b16 %v214
    %v865 = vunpack.c.h.b16 %v214
    %v866 = vunpack.c.l.b16 %v215
    %v867 = vunpack.c.h.b16 %v215
    %v868 = vunpack.c.l.b16 %v216
    %v869 = vunpack.c.h.b16 %v216
    %v870 = vunpack.c.l.b16 %v217
    %v871 = vunpack.c.h.b16 %v217
    %v872 = vunpack.c.l.b16 %v218
    %v873 = vunpack.c.h.b16 %v218
    %v874 = vunpack.c.l.b16 %v219
    %v875 = vunpack.c.h.b16 %v219
    %v876 = vunpack.c.l.b16 %v220
    %v877 = vunpack.c.h.b16 %v220
    %v878 = vunpack.c.l.b16 %v221
    %v879 = vunpack.c.h.b16 %v221
    %v880 = vunpack.c.l.b16 %v222
    %v881 = vunpack.c.h.b16 %v222
    %v882 = vunpack.c.l.b16 %v223
    %v883 = vunpack.c.h.b16 %v223
    %v884 = vunpack.c.l.b16 %v224
    %v885 = vunpack.c.h.b16 %v224
    %v886 = vunpack.c.l.b16 %v225
    %v887 = vunpack.c.h.b16 %v225
    %v888 = vunpack.c.l.b16 %v226
    %v889 = vunpack.c.h.b16 %v226
    %v890 = vunpack.c.l.b16 %v227
    %v891 = vunpack.c.h.b16 %v227
    %v892 = vunpack.c.l.b16 %v228
    %v893 = vunpack.c.h.b16 %v228
    %v894 = vunpack.c.l.b16 %v229
    %v895 = vunpack.c.h.b16 %v229
    %v896 = vunpack.c.l.b16 %v230
    %v897 = vunpack.c.h.b16 %v230
    %v898 = vunpack.c.l.b16 %v231
    %v899 = vunpack.c.h.b16 %v231
    %v900 = vunpack.c.l.b16 %v232
    %v901 = vunpack.c.h.b16 %v232
    %v902 = vunpack.c.l.b16 %v233
    %v903 = vunpack.c.h.b16 %v233
    %v904 = vunpack.c.l.b16 %v234
    %v905 = vunpack.c.h.b16 %v234
    %v906 = vunpack.c.l.b16 %v235
    %v907 = vunpack.c.h.b16 %v235
    %v908 = vunpack.c.l.b16 %v236
    %v909 = vunpack.c.h.b16 %v236
    %v910 = vunpack.c.l.b16 %v237
    %v911 = vunpack.c.h.b16 %v237
    %v912 = vunpack.c.l.b16 %v238
    %v913 = vunpack.c.h.b16 %v238
    %v914 = vunpack.c.l.b16 %v239
    %v915 = vunpack.c.h.b16 %v239
    %v916 = vunpack.c.l.b16 %v240
    %v917 = vunpack.c.h.b16 %v240
    %v918 = vunpack.c.l.b16 %v241
    %v919 = vunpack.c.h.b16 %v241
    %v920 = vunpack.c.l.b16 %v242
    %v921 = vunpack.c.h.b16 %v242
    %v922 = vunpack.c.l.b16 %v243
    %v923 = vunpack.c.h.b16 %v243
    %v924 = vunpack.c.l.b16 %v244
    %v925 = vunpack.c.h.b16 %v244
    %v926 = vunpack.c.l.b16 %v245
    %v927 = vunpack.c.h.b16 %v245
    %v928 = vunpack.c.l.b16 %v246
    %v929 = vunpack.c.h.b16 %v246
    %v930 = vunpack.c.l.b16 %v247
    %v931 = vunpack.c.h.b16 %v247
    %v932 = vunpack.c.l.b16 %v248
    %v933 = vunpack.c.h.b16 %v248
    %v934 = vunpack.c.l.b16 %v249
    %v935 = vunpack.c.h.b16 %v249
    %v936 = vunpack.c.l.b16 %v250
    %v937 = vunpack.c.h.b16 %v250
    %v938 = vunpack.c.l.b16 %v251
    %v939 = vunpack.c.h.b16 %v251
    %v940 = vunpack.c.l.b16 %v252
    %v941 = vunpack.c.h.b16 %v252
    %v942 = vunpack.c.l.b16 %v253
    %v943 = vunpack.c.h.b16 %v253
    %v944 = vunpack.c.l.b16 %v254
    %v945 = vunpack.c.h.b16 %v254
    %v946 = vunpack.c.l.b16 %v255
    %v947 = vunpack.c.h.b16 %v255
    %v948 = vunpack.c.l.b16 %v256
    %v949 = vunpack.c.h.b16 %v256
    %v950 = vunpack.c.l.b16 %v257
    %v951 = vunpack.c.h.b16 %v257
    %v952 = vunpack.c.l.b16 %v258
    %v953 = vunpack.c.h.b16 %v258
    %v954 = vunpack.c.l.b16 %v259
    %v955 = vunpack.c.h.b16 %v259
    %v956 = vunpack.c.l.b16 %v260
    %v957 = vunpack.c.h.b16 %v260
    %v958 = vunpack.c.l.b16 %v261
    %v959 = vunpack.c.h.b16 %v261
    %v960 = vunpack.c.l.b16 %v262
    %v961 = vunpack.c.h.b16 %v262
    %v962 = vunpack.c.l.b16 %v263
    %v963 = vunpack.c.h.b16 %v263
    %v964 = vunpack.c.l.b16 %v264
    %v965 = vunpack.c.h.b16 %v264
    %v966 = vunpack.c.l.b16 %v265
    %v967 = vunpack.c.h.b16 %v265
    %v968 = vunpack.c.l.b16 %v266
    %v969 = vunpack.c.h.b16 %v266
    %v970 = vunpack.c.l.b16 %v267
    %v971 = vunpack.c.h.b16 %v267
    %v972 = vunpack.c.l.b16 %v268
    %v973 = vunpack.c.h.b16 %v268
    %v974 = vunpack.c.l.b16 %v269
    %v975 = vunpack.c.h.b16 %v269
    %v976 = vunpack.c.l.b16 %v270
    %v977 = vunpack.c.h.b16 %v270
    %v978 = vunpack.c.l.b16 %v271
    %v979 = vunpack.c.h.b16 %v271
    %v980 = vunpack.c.l.b16 %v272
    %v981 = vunpack.c.h.b16 %v272
    %v982 = vunpack.c.l.b16 %v273
    %v983 = vunpack.c.h.b16 %v273
    %v984 = vunpack.c.l.b16 %v274
    %v985 = vunpack.c.h.b16 %v274
    %v986 = vunpack.c.l.b16 %v275
    %v987 = vunpack.c.h.b16 %v275
    %v988 = vunpack.c.l.b16 %v276
    %v989 = vunpack.c.h.b16 %v276
    %v990 = vunpack.c.l.b16 %v277
    %v991 = vunpack.c.h.b16 %v277
    %v992 = vunpack.c.l.b16 %v278
    %v993 = vunpack.c.h.b16 %v278
    %v994 = vunpack.c.l.b16 %v279
    %v995 = vunpack.c.h.b16 %v279
    %v996 = vunpack.c.l.b16 %v280
    %v997 = vunpack.c.h.b16 %v280
    %v998 = vunpack.c.l.b16 %v281
    %v999 = vunpack.c.h.b16 %v281
    %v1000 = vunpack.c.l.b16 %v282
    %v1001 = vunpack.c.h.b16 %v282
    %v1002 = vpack.c.b16 %v558, %v554
    %v1003 = vpack.c.b16 %v559, %v555
    %v1004 = vpack.c.b16 %v560, %v556
    %v1005 = vpack.c.b16 %v561, %v557
    %v1006 = vpack.c.b16 %v566, %v562
    %v1007 = vpack.c.b16 %v567, %v563
    %v1008 = vpack.c.b16 %v568, %v564
    %v1009 = vpack.c.b16 %v569, %v565
    %v1010 = vpack.c.b16 %v574, %v570
    %v1011 = vpack.c.b16 %v575, %v571
    %v1012 = vpack.c.b16 %v576, %v572
    %v1013 = vpack.c.b16 %v577, %v573
    %v1014 = vpack.c.b16 %v582, %v578
    %v1015 = vpack.c.b16 %v583, %v579
    %v1016 = vpack.c.b16 %v584, %v580
    %v1017 = vpack.c.b16 %v585, %v581
    %v1018 = vpack.c.b16 %v590, %v586
    %v1019 = vpack.c.b16 %v591, %v587
    %v1020 = vpack.c.b16 %v592, %v588
    %v1021 = vpack.c.b16 %v593, %v589
    %v1022 = vpack.c.b16 %v598, %v594
    %v1023 = vpack.c.b16 %v599, %v595
    %v1024 = vpack.c.b16 %v600, %v596
    %v1025 = vpack.c.b16 %v601, %v597
    %v1026 = vpack.c.b16 %v606, %v602
    %v1027 = vpack.c.b16 %v607, %v603
    %v1028 = vpack.c.b16 %v608, %v604
    %v1029 = vpack.c.b16 %v609, %v605
    %v1030 = vpack.c.b16 %v614, %v610
    %v1031 = vpack.c.b16 %v615, %v611
    %v1032 = vpack.c.b16 %v616, %v612
    %v1033 = vpack.c.b16 %v617, %v613
    %v1034 = vpack.c.b16 %v622, %v618
    %v1035 = vpack.c.b16 %v623, %v619
    %v1036 = vpack.c.b16 %v624, %v620
    %v1037 = vpack.c.b16 %v625, %v621
    %v1038 = vpack.c.b16 %v630, %v626
    %v1039 = vpack.c.b16 %v631, %v627
    %v1040 = vpack.c.b16 %v632, %v628
    %v1041 = vpack.c.b16 %v633, %v629
    %v1042 = vpack.c.b16 %v638, %v634
    %v1043 = vpack.c.b16 %v639, %v635
    %v1044 = vpack.c.b16 %v640, %v636
    %v1045 = vpack.c.b16 %v641, %v637
    %v1046 = vpack.c.b16 %v646, %v642
    %v1047 = vpack.c.b16 %v647, %v643
    %v1048 = vpack.c.b16 %v648, %v644
    %v1049 = vpack.c.b16 %v649, %v645
    %v1050 = vpack.c.b16 %v654, %v650
    %v1051 = vpack.c.b16 %v655, %v651
    %v1052 = vpack.c.b16 %v656, %v652
    %v1053 = vpack.c.b16 %v657, %v653
    %v1054 = vpack.c.b16 %v662, %v658
    %v1055 = vpack.c.b16 %v663, %v659
    %v1056 = vpack.c.b16 %v664, %v660
    %v1057 = vpack.c.b16 %v665, %v661
    %v1058 = vpack.c.b16 %v670, %v666
    %v1059 = vpack.c.b16 %v671, %v667
    %v1060 = vpack.c.b16 %v672, %v668
    %v1061 = vpack.c.b16 %v673, %v669
    %v1062 = vpack.c.b16 %v678, %v674
    %v1063 = vpack.c.b16 %v679, %v675
    %v1064 = vpack.c.b16 %v680, %v676
    %v1065 = vpack.c.b16 %v681, %v677
    %v1066 = vpack.c.b16 %v686, %v682
    %v1067 = vpack.c.b16 %v687, %v683
    %v1068 = vpack.c.b16 %v688, %v684
    %v1069 = vpack.c.b16 %v689, %v685
    %v1070 = vpack.c.b16 %v694, %v690
    %v1071 = vpack.c.b16 %v695, %v691
    %v1072 = vpack.c.b16 %v696, %v692
    %v1073 = vpack.c.b16 %v697, %v693
    %v1074 = vpack.c.b16 %v702, %v698
    %v1075 = vpack.c.b16 %v703, %v699
    %v1076 = vpack.c.b16 %v704, %v700
    %v1077 = vpack.c.b16 %v705, %v701
    %v1078 = vpack.c.b16 %v710, %v706
    %v1079 = vpack.c.b16 %v711, %v707
    %v1080 = vpack.c.b16 %v712, %v708
    %v1081 = vpack.c.b16 %v713, %v709
    %v1082 = vpack.c.b16 %v718, %v714
    %v1083 = vpack.c.b16 %v719, %v715
    %v1084 = vpack.c.b16 %v720, %v716
    %v1085 = vpack.c.b16 %v721, %v717
    %v1086 = vpack.c.b16 %v726, %v722
    %v1087 = vpack.c.b16 %v727, %v723
    %v1088 = vpack.c.b16 %v728, %v724
    %v1089 = vpack.c.b16 %v729, %v725
    %v1090 = vpack.c.b16 %v734, %v730
    %v1091 = vpack.c.b16 %v735, %v731
    %v1092 = vpack.c.b16 %v736, %v732
    %v1093 = vpack.c.b16 %v737, %v733
    %v1094 = vpack.c.b16 %v742, %v738
    %v1095 = vpack.c.b16 %v743, %v739
    %v1096 = vpack.c.b16 %v744, %v740
    %v1097 = vpack.c.b16 %v745, %v741
    %v1098 = vpack.c.b16 %v750, %v746
    %v1099 = vpack.c.b16 %v751, %v747
    %v1100 = vpack.c.b16 %v752, %v748
    %v1101 = vpack.c.b16 %v753, %v749
    %v1102 = vpack.c.b16 %v758, %v754
    %v1103 = vpack.c.b16 %v759, %v755
    %v1104 = vpack.c.b16 %v760, %v756
    %v1105 = vpack.c.b16 %v761, %v757
    %v1106 = vpack.c.b16 %v766, %v762
    %v1107 = vpack.c.b16 %v767, %v763
    %v1108 = vpack.c.b16 %v768, %v764
    %v1109 = vpack.c.b16 %v769, %v765
    %v1110 = vpack.c.b16 %v774, %v770
    %v1111 = vpack.c.b16 %v775, %v771
    %v1112 = vpack.c.b16 %v776, %v772
    %v1113 = vpack.c.b16 %v777, %v773
    %v1114 = vpack.c.b16 %v782, %v778
    %v1115 = vpack.c.b16 %v783, %v779
    %v1116 = vpack.c.b16 %v784, %v780
    %v1117 = vpack.c.b16 %v785, %v781
    %v1118 = vpack.c.b16 %v790, %v786
    %v1119 = vpack.c.b16 %v791, %v787
    %v1120 = vpack.c.b16 %v792, %v788
    %v1121 = vpack.c.b16 %v793, %v789
    %v1122 = vpack.c.b16 %v798, %v794
    %v1123 = vpack.c.b16 %v799, %v795
    %v1124 = vpack.c.b16 %v800, %v796
    %v1125 = vpack.c.b16 %v801, %v797
    %v1126 = vpack.c.b16 %v806, %v802
    %v1127 = vpack.c.b16 %v807, %v803
    %v1128 = vpack.c.b16 %v808, %v804
    %v1129 = vpack.c.b16 %v809, %v805
    %v1130 = vpack.c.b16 %v814, %v810
    %v1131 = vpack.c.b16 %v815, %v811
    %v1132 = vpack.c.b16 %v816, %v812
    %v1133 = vpack.c.b16 %v817, %v813
    %v1134 = vpack.c.b16 %v822, %v818
    %v1135 = vpack.c.b16 %v823, %v819
    %v1136 = vpack.c.b16 %v824, %v820
    %v1137 = vpack.c.b16 %v825, %v821
    %v1138 = vpack.c.b16 %v830, %v826
    %v1139 = vpack.c.b16 %v831, %v827
    %v1140 = vpack.c.b16 %v832, %v828
    %v1141 = vpack.c.b16 %v833, %v829
    %v1142 = vpack.c.b16 %v838, %v834
    %v1143 = vpack.c.b16 %v839, %v835
    %v1144 = vpack.c.b16 %v840, %v836
    %v1145 = vpack.c.b16 %v841, %v837
    %v1146 = vpack.c.b16 %v846, %v842
    %v1147 = vpack.c.b16 %v847, %v843
    %v1148 = vpack.c.b16 %v848, %v844
    %v1149 = vpack.c.b16 %v849, %v845
    %v1150 = vpack.c.b16 %v854, %v850
    %v1151 = vpack.c.b16 %v855, %v851
    %v1152 = vpack.c.b16 %v856, %v852
    %v1153 = vpack.c.b16 %v857, %v853
    %v1154 = vpack.c.b16 %v862, %v858
    %v1155 = vpack.c.b16 %v863, %v859
    %v1156 = vpack.c.b16 %v864, %v860
    %v1157 = vpack.c.b16 %v865, %v861
    %v1158 = vpack.c.b16 %v870, %v866
    %v1159 = vpack.c.b16 %v871, %v867
    %v1160 = vpack.c.b16 %v872, %v868
    %v1161 = vpack.c.b16 %v873, %v869
    %v1162 = vpack.c.b16 %v878, %v874
    %v1163 = vpack.c.b16 %v879, %v875
    %v1164 = vpack.c.b16 %v880, %v876
    %v1165 = vpack.c.b16 %v881, %v877
    %v1166 = vpack.c.b16 %v886, %v882
    %v1167 = vpack.c.b16 %v887, %v883
    %v1168 = vpack.c.b16 %v888, %v884
    %v1169 = vpack.c.b16 %v889, %v885
    %v1170 = vpack.c.b16 %v894, %v890
    %v1171 = vpack.c.b16 %v895, %v891
    %v1172 = vpack.c.b16 %v896, %v892
    %v1173 = vpack.c.b16 %v897, %v893
    %v1174 = vpack.c.b16 %v902, %v898
    %v1175 = vpack.c.b16 %v903, %v899
    %v1176 = vpack.c.b16 %v904, %v900
    %v1177 = vpack.c.b16 %v905, %v901
    %v1178 = vpack.c.b16 %v910, %v906
    %v1179 = vpack.c.b16 %v911, %v907
    %v1180 = vpack.c.b16 %v912, %v908
    %v1181 = vpack.c.b16 %v913, %v909
    %v1182 = vpack.c.b16 %v918, %v914
    %v1183 = vpack.c.b16 %v919, %v915
    %v1184 = vpack.c.b16 %v920, %v916
    %v1185 = vpack.c.b16 %v921, %v917
    %v1186 = vpack.c.b16 %v926, %v922
    %v1187 = vpack.c.b16 %v927, %v923
    %v1188 = vpack.c.b16 %v928, %v924
    %v1189 = vpack.c.b16 %v929, %v925
    %v1190 = vpack.c.b16 %v934, %v930
    %v1191 = vpack.c.b16 %v935, %v931
    %v1192 = vpack.c.b16 %v936, %v932
    %v1193 = vpack.c.b16 %v937, %v933
    %v1194 = vpack.c.b16 %v942, %v938
    %v1195 = vpack.c.b16 %v943, %v939
    %v1196 = vpack.c.b16 %v944, %v940
    %v1197 = vpack.c.b16 %v945, %v941
    %v1198 = vpack.c.b16 %v950, %v946
    %v1199 = vpack.c.b16 %v951, %v947
    %v1200 = vpack.c.b16 %v952, %v948
    %v1201 = vpack.c.b16 %v953, %v949
    %v1202 = vpack.c.b16 %v958, %v954
    %v1203 = vpack.c.b16 %v959, %v955
    %v1204 = vpack.c.b16 %v960, %v956
    %v1205 = vpack.c.b16 %v961, %v957
    %v1206 = vpack.c.b16 %v966, %v962
    %v1207 = vpack.c.b16 %v967, %v963
    %v1208 = vpack.c.b16 %v968, %v964
    %v1209 = vpack.c.b16 %v969, %v965
    %v1210 = vpack.c.b16 %v974, %v970
    %v1211 = vpack.c.b16 %v975, %v971
    %v1212 = vpack.c.b16 %v976, %v972
    %v1213 = vpack.c.b16 %v977, %v973
    %v1214 = vpack.c.b16 %v982, %v978
    %v1215 = vpack.c.b16 %v983, %v979
    %v1216 = vpack.c.b16 %v984, %v980
    %v1217 = vpack.c.b16 %v985, %v981
    %v1218 = vpack.c.b16 %v990, %v986
    %v1219 = vpack.c.b16 %v991, %v987
    %v1220 = vpack.c.b16 %v992, %v988
    %v1221 = vpack.c.b16 %v993, %v989
    %v1222 = vpack.c.b16 %v998, %v994
    %v1223 = vpack.c.b16 %v999, %v995
    %v1224 = vpack.c.b16 %v1000, %v996
    %v1225 = vpack.c.b16 %v1001, %v997
    %1450 = vmatprep.subr.bf16.mxu0 %v1003
    %1451 = vmatpush1.bf16.msra.mxu0 %v1002
    %1452 = vmatprep.subr.bf16.mxu0 %v1007
    %1453 = vmatpush1.bf16.msra.mxu0 %v1006
    %1454 = vmatprep.subr.bf16.mxu0 %v1011
    %1455 = vmatpush1.bf16.msra.mxu0 %v1010
    %1456 = vmatprep.subr.bf16.mxu0 %v1015
    %1457 = vmatpush1.bf16.msra.mxu0 %v1014
    %1458 = vmatprep.subr.bf16.mxu0 %v1019
    %1459 = vmatpush1.bf16.msra.mxu0 %v1018
    %1460 = vmatprep.subr.bf16.mxu0 %v1023
    %1461 = vmatpush1.bf16.msra.mxu0 %v1022
    %1462 = vmatprep.subr.bf16.mxu0 %v1027
    %1463 = vmatpush1.bf16.msra.mxu0 %v1026
    %1464 = vmatprep.subr.bf16.mxu0 %v1031
    %1465 = vmatpush1.bf16.msra.mxu0 %v1030
    %1466 = vmatprep.subr.bf16.mxu0 %v1035
    %1467 = vmatpush1.bf16.msra.mxu0 %v1034
    %1468 = vmatprep.subr.bf16.mxu0 %v1039
    %1469 = vmatpush1.bf16.msra.mxu0 %v1038
    %1470 = vmatprep.subr.bf16.mxu0 %v1043
    %1471 = vmatpush1.bf16.msra.mxu0 %v1042
    %1472 = vmatprep.subr.bf16.mxu0 %v1047
    %1473 = vmatpush1.bf16.msra.mxu0 %v1046
    %1474 = vmatprep.subr.bf16.mxu0 %v1051
    %1475 = vmatpush1.bf16.msra.mxu0 %v1050
    %1476 = vmatprep.subr.bf16.mxu0 %v1055
    %1477 = vmatpush1.bf16.msra.mxu0 %v1054
    %1478 = vmatprep.subr.bf16.mxu0 %v1059
    %1479 = vmatpush1.bf16.msra.mxu0 %v1058
    %1480 = vmatprep.subr.bf16.mxu0 %v1063
    %1481 = vmatpush1.bf16.msra.mxu0 %v1062
    %1482 = vmatprep.mubr.bf16.mxu0 %v317
    %1483 = vmatmul.mubr.bf16.gmra.mrb[0].mxu0 %v316
    %v1484 = vpop.f32.mrb[0].mxu0
    %v1485 = vadd.f32 %v288, %v1484
    %v1486 = vpop.f32.mrb[0].mxu0
    %v1487 = vadd.f32 %v292, %v1486
    %v1488 = vpop.f32.mrb[0].mxu0
    %v1489 = vpop.f32.mrb[0].mxu0
    %1490 = vdwg.mxu0
    %1491 = vmatprep.subr.bf16.mxu0 %v1067
    %1492 = vmatpush1.bf16.msra.mxu0 %v1066
    %1493 = vmatprep.subr.bf16.mxu0 %v1071
    %1494 = vmatpush1.bf16.msra.mxu0 %v1070
    %1495 = vmatprep.subr.bf16.mxu0 %v1075
    %1496 = vmatpush1.bf16.msra.mxu0 %v1074
    %1497 = vmatprep.subr.bf16.mxu0 %v1079
    %1498 = vmatpush1.bf16.msra.mxu0 %v1078
    %1499 = vmatprep.subr.bf16.mxu0 %v1083
    %1500 = vmatpush1.bf16.msra.mxu0 %v1082
    %1501 = vmatprep.subr.bf16.mxu0 %v1087
    %1502 = vmatpush1.bf16.msra.mxu0 %v1086
    %1503 = vmatprep.subr.bf16.mxu0 %v1091
    %1504 = vmatpush1.bf16.msra.mxu0 %v1090
    %1505 = vmatprep.subr.bf16.mxu0 %v1095
    %1506 = vmatpush1.bf16.msra.mxu0 %v1094
    %1507 = vmatprep.subr.bf16.mxu0 %v1099
    %1508 = vmatpush1.bf16.msra.mxu0 %v1098
    %1509 = vmatprep.subr.bf16.mxu0 %v1103
    %1510 = vmatpush1.bf16.msra.mxu0 %v1102
    %1511 = vmatprep.subr.bf16.mxu0 %v1107
    %1512 = vmatpush1.bf16.msra.mxu0 %v1106
    %1513 = vmatprep.subr.bf16.mxu0 %v1111
    %1514 = vmatpush1.bf16.msra.mxu0 %v1110
    %1515 = vmatprep.subr.bf16.mxu0 %v1115
    %1516 = vmatpush1.bf16.msra.mxu0 %v1114
    %1517 = vmatprep.subr.bf16.mxu0 %v1119
    %1518 = vmatpush1.bf16.msra.mxu0 %v1118
    %1519 = vmatprep.subr.bf16.mxu0 %v1123
    %1520 = vmatpush1.bf16.msra.mxu0 %v1122
    %1521 = vmatprep.subr.bf16.mxu0 %v1127
    %1522 = vmatpush1.bf16.msra.mxu0 %v1126
    %1523 = vmatprep.mubr.bf16.mxu0 %v319
    %1524 = vmatmul.mubr.bf16.gmra.mrb[0].mxu0 %v318
    %v1525 = vpop.f32.mrb[0].mxu0
    %v1526 = vadd.f32 %v1485, %v1525
    %v1527 = vpop.f32.mrb[0].mxu0
    %v1528 = vadd.f32 %v1487, %v1527
    %v1529 = vpop.f32.mrb[0].mxu0
    %v1530 = vpop.f32.mrb[0].mxu0
    %1531 = vdwg.mxu0
    %1532 = vmatprep.subr.bf16.mxu0 %v1131
    %1533 = vmatpush1.bf16.msra.mxu0 %v1130
    %1534 = vmatprep.subr.bf16.mxu0 %v1135
    %1535 = vmatpush1.bf16.msra.mxu0 %v1134
    %1536 = vmatprep.subr.bf16.mxu0 %v1139
    %1537 = vmatpush1.bf16.msra.mxu0 %v1138
    %1538 = vmatprep.subr.bf16.mxu0 %v1143
    %1539 = vmatpush1.bf16.msra.mxu0 %v1142
    %1540 = vmatprep.subr.bf16.mxu0 %v1147
    %1541 = vmatpush1.bf16.msra.mxu0 %v1146
    %1542 = vmatprep.subr.bf16.mxu0 %v1151
    %1543 = vmatpush1.bf16.msra.mxu0 %v1150
    %1544 = vmatprep.subr.bf16.mxu0 %v1155
    %1545 = vmatpush1.bf16.msra.mxu0 %v1154
    %1546 = vmatprep.subr.bf16.mxu0 %v1159
    %1547 = vmatpush1.bf16.msra.mxu0 %v1158
    %1548 = vmatprep.subr.bf16.mxu0 %v1163
    %1549 = vmatpush1.bf16.msra.mxu0 %v1162
    %1550 = vmatprep.subr.bf16.mxu0 %v1167
    %1551 = vmatpush1.bf16.msra.mxu0 %v1166
    %1552 = vmatprep.subr.bf16.mxu0 %v1171
    %1553 = vmatpush1.bf16.msra.mxu0 %v1170
    %1554 = vmatprep.subr.bf16.mxu0 %v1175
    %1555 = vmatpush1.bf16.msra.mxu0 %v1174
    %1556 = vmatprep.subr.bf16.mxu0 %v1179
    %1557 = vmatpush1.bf16.msra.mxu0 %v1178
    %1558 = vmatprep.subr.bf16.mxu0 %v1183
    %1559 = vmatpush1.bf16.msra.mxu0 %v1182
    %1560 = vmatprep.subr.bf16.mxu0 %v1187
    %1561 = vmatpush1.bf16.msra.mxu0 %v1186
    %1562 = vmatprep.subr.bf16.mxu0 %v1191
    %1563 = vmatpush1.bf16.msra.mxu0 %v1190
    %1564 = vmatprep.mubr.bf16.mxu0 %v321
    %1565 = vmatmul.mubr.bf16.gmra.mrb[0].mxu0 %v320
    %v1566 = vpop.f32.mrb[0].mxu0
    %v1567 = vadd.f32 %v1526, %v1566
    %v1568 = vpop.f32.mrb[0].mxu0
    %v1569 = vadd.f32 %v1528, %v1568
    %v1570 = vpop.f32.mrb[0].mxu0
    %v1571 = vpop.f32.mrb[0].mxu0
    %1572 = vdwg.mxu0
    %1573 = vmatprep.subr.bf16.mxu0 %v1195
    %1574 = vmatpush1.bf16.msra.mxu0 %v1194
    %1575 = vmatprep.subr.bf16.mxu0 %v1199
    %1576 = vmatpush1.bf16.msra.mxu0 %v1198
    %1577 = vmatprep.subr.bf16.mxu0 %v1203
    %1578 = vmatpush1.bf16.msra.mxu0 %v1202
    %1579 = vmatprep.subr.bf16.mxu0 %v1207
    %1580 = vmatpush1.bf16.msra.mxu0 %v1206
    %1581 = vmatprep.subr.bf16.mxu0 %v1211
    %1582 = vmatpush1.bf16.msra.mxu0 %v1210
    %1583 = vmatprep.subr.bf16.mxu0 %v1215
    %1584 = vmatpush1.bf16.msra.mxu0 %v1214
    %1585 = vmatprep.subr.bf16.mxu0 %v1219
    %1586 = vmatpush1.bf16.msra.mxu0 %v1218
    %1587 = vmatprep.subr.bf16.mxu0 %v1223
    %1588 = vmatpush1.bf16.msra.mxu0 %v1222
    %1589 = vmatprep.subr.bf16.mxu0 0
    %1590 = vmatpush1.bf16.msra.mxu0 0
    %1591 = vmatprep.subr.bf16.mxu0 0
    %1592 = vmatpush1.bf16.msra.mxu0 0
    %1593 = vmatprep.subr.bf16.mxu0 0
    %1594 = vmatpush1.bf16.msra.mxu0 0
    %1595 = vmatprep.subr.bf16.mxu0 0
    %1596 = vmatpush1.bf16.msra.mxu0 0
    %1597 = vmatprep.subr.bf16.mxu0 0
    %1598 = vmatpush1.bf16.msra.mxu0 0
    %1599 = vmatprep.subr.bf16.mxu0 0
    %1600 = vmatpush1.bf16.msra.mxu0 0
    %1601 = vmatprep.subr.bf16.mxu0 0
    %1602 = vmatpush1.bf16.msra.mxu0 0
    %1603 = vmatprep.subr.bf16.mxu0 0
    %1604 = vmatpush1.bf16.msra.mxu0 0
    %1605 = vmatprep.mubr.bf16.mxu0 0
    %1606 = vmatmul.mubr.bf16.gmra.mrb[0].mxu0 %v322
    %v1607 = vpop.f32.mrb[0].mxu0
    %v1608 = vadd.f32 %v1567, %v1607
    %v1609 = vpop.f32.mrb[0].mxu0
    %v1610 = vadd.f32 %v1569, %v1609
    %v1611 = vpop.f32.mrb[0].mxu0
    %v1612 = vpop.f32.mrb[0].mxu0
    %1613 = vdwg.mxu0
    %1614 = vmatprep.subr.bf16.mxu0 %v1005
    %1615 = vmatpush1.bf16.msra.mxu0 %v1004
    %1616 = vmatprep.subr.bf16.mxu0 %v1009
    %1617 = vmatpush1.bf16.msra.mxu0 %v1008
    %1618 = vmatprep.subr.bf16.mxu0 %v1013
    %1619 = vmatpush1.bf16.msra.mxu0 %v1012
    %1620 = vmatprep.subr.bf16.mxu0 %v1017
    %1621 = vmatpush1.bf16.msra.mxu0 %v1016
    %1622 = vmatprep.subr.bf16.mxu0 %v1021
    %1623 = vmatpush1.bf16.msra.mxu0 %v1020
    %1624 = vmatprep.subr.bf16.mxu0 %v1025
    %1625 = vmatpush1.bf16.msra.mxu0 %v1024
    %1626 = vmatprep.subr.bf16.mxu0 %v1029
    %1627 = vmatpush1.bf16.msra.mxu0 %v1028
    %1628 = vmatprep.subr.bf16.mxu0 %v1033
    %1629 = vmatpush1.bf16.msra.mxu0 %v1032
    %1630 = vmatprep.subr.bf16.mxu0 %v1037
    %1631 = vmatpush1.bf16.msra.mxu0 %v1036
    %1632 = vmatprep.subr.bf16.mxu0 %v1041
    %1633 = vmatpush1.bf16.msra.mxu0 %v1040
    %1634 = vmatprep.subr.bf16.mxu0 %v1045
    %1635 = vmatpush1.bf16.msra.mxu0 %v1044
    %1636 = vmatprep.subr.bf16.mxu0 %v1049
    %1637 = vmatpush1.bf16.msra.mxu0 %v1048
    %1638 = vmatprep.subr.bf16.mxu0 %v1053
    %1639 = vmatpush1.bf16.msra.mxu0 %v1052
    %1640 = vmatprep.subr.bf16.mxu0 %v1057
    %1641 = vmatpush1.bf16.msra.mxu0 %v1056
    %1642 = vmatprep.subr.bf16.mxu0 %v1061
    %1643 = vmatpush1.bf16.msra.mxu0 %v1060
    %1644 = vmatprep.subr.bf16.mxu0 %v1065
    %1645 = vmatpush1.bf16.msra.mxu0 %v1064
    %1646 = vmatprep.mubr.bf16.mxu0 %v317
    %1647 = vmatmul.mubr.bf16.gmra.mrb[0].mxu0 %v316
    %v1648 = vpop.f32.mrb[0].mxu0
    %v1649 = vadd.f32 %v296, %v1648
    %v1650 = vpop.f32.mrb[0].mxu0
    %v1651 = vadd.f32 %v300, %v1650
    %v1652 = vpop.f32.mrb[0].mxu0
    %v1653 = vpop.f32.mrb[0].mxu0
    %1654 = vdwg.mxu0
    %1655 = vmatprep.subr.bf16.mxu0 %v1069
    %1656 = vmatpush1.bf16.msra.mxu0 %v1068
    %1657 = vmatprep.subr.bf16.mxu0 %v1073
    %1658 = vmatpush1.bf16.msra.mxu0 %v1072
    %1659 = vmatprep.subr.bf16.mxu0 %v1077
    %1660 = vmatpush1.bf16.msra.mxu0 %v1076
    %1661 = vmatprep.subr.bf16.mxu0 %v1081
    %1662 = vmatpush1.bf16.msra.mxu0 %v1080
    %1663 = vmatprep.subr.bf16.mxu0 %v1085
    %1664 = vmatpush1.bf16.msra.mxu0 %v1084
    %1665 = vmatprep.subr.bf16.mxu0 %v1089
    %1666 = vmatpush1.bf16.msra.mxu0 %v1088
    %1667 = vmatprep.subr.bf16.mxu0 %v1093
    %1668 = vmatpush1.bf16.msra.mxu0 %v1092
    %1669 = vmatprep.subr.bf16.mxu0 %v1097
    %1670 = vmatpush1.bf16.msra.mxu0 %v1096
    %1671 = vmatprep.subr.bf16.mxu0 %v1101
    %1672 = vmatpush1.bf16.msra.mxu0 %v1100
    %1673 = vmatprep.subr.bf16.mxu0 %v1105
    %1674 = vmatpush1.bf16.msra.mxu0 %v1104
    %1675 = vmatprep.subr.bf16.mxu0 %v1109
    %1676 = vmatpush1.bf16.msra.mxu0 %v1108
    %1677 = vmatprep.subr.bf16.mxu0 %v1113
    %1678 = vmatpush1.bf16.msra.mxu0 %v1112
    %1679 = vmatprep.subr.bf16.mxu0 %v1117
    %1680 = vmatpush1.bf16.msra.mxu0 %v1116
    %1681 = vmatprep.subr.bf16.mxu0 %v1121
    %1682 = vmatpush1.bf16.msra.mxu0 %v1120
    %1683 = vmatprep.subr.bf16.mxu0 %v1125
    %1684 = vmatpush1.bf16.msra.mxu0 %v1124
    %1685 = vmatprep.subr.bf16.mxu0 %v1129
    %1686 = vmatpush1.bf16.msra.mxu0 %v1128
    %1687 = vmatprep.mubr.bf16.mxu0 %v319
    %1688 = vmatmul.mubr.bf16.gmra.mrb[0].mxu0 %v318
    %v1689 = vpop.f32.mrb[0].mxu0
    %v1690 = vadd.f32 %v1649, %v1689
    %v1691 = vpop.f32.mrb[0].mxu0
    %v1692 = vadd.f32 %v1651, %v1691
    %v1693 = vpop.f32.mrb[0].mxu0
    %v1694 = vpop.f32.mrb[0].mxu0
    %1695 = vdwg.mxu0
    %1696 = vmatprep.subr.bf16.mxu0 %v1133
    %1697 = vmatpush1.bf16.msra.mxu0 %v1132
    %1698 = vmatprep.subr.bf16.mxu0 %v1137
    %1699 = vmatpush1.bf16.msra.mxu0 %v1136
    %1700 = vmatprep.subr.bf16.mxu0 %v1141
    %1701 = vmatpush1.bf16.msra.mxu0 %v1140
    %1702 = vmatprep.subr.bf16.mxu0 %v1145
    %1703 = vmatpush1.bf16.msra.mxu0 %v1144
    %1704 = vmatprep.subr.bf16.mxu0 %v1149
    %1705 = vmatpush1.bf16.msra.mxu0 %v1148
    %1706 = vmatprep.subr.bf16.mxu0 %v1153
    %1707 = vmatpush1.bf16.msra.mxu0 %v1152
    %1708 = vmatprep.subr.bf16.mxu0 %v1157
    %1709 = vmatpush1.bf16.msra.mxu0 %v1156
    %1710 = vmatprep.subr.bf16.mxu0 %v1161
    %1711 = vmatpush1.bf16.msra.mxu0 %v1160
    %1712 = vmatprep.subr.bf16.mxu0 %v1165
    %1713 = vmatpush1.bf16.msra.mxu0 %v1164
    %1714 = vmatprep.subr.bf16.mxu0 %v1169
    %1715 = vmatpush1.bf16.msra.mxu0 %v1168
    %1716 = vmatprep.subr.bf16.mxu0 %v1173
    %1717 = vmatpush1.bf16.msra.mxu0 %v1172
    %1718 = vmatprep.subr.bf16.mxu0 %v1177
    %1719 = vmatpush1.bf16.msra.mxu0 %v1176
    %1720 = vmatprep.subr.bf16.mxu0 %v1181
    %1721 = vmatpush1.bf16.msra.mxu0 %v1180
    %1722 = vmatprep.subr.bf16.mxu0 %v1185
    %1723 = vmatpush1.bf16.msra.mxu0 %v1184
    %1724 = vmatprep.subr.bf16.mxu0 %v1189
    %1725 = vmatpush1.bf16.msra.mxu0 %v1188
    %1726 = vmatprep.subr.bf16.mxu0 %v1193
    %1727 = vmatpush1.bf16.msra.mxu0 %v1192
    %1728 = vmatprep.mubr.bf16.mxu0 %v321
    %1729 = vmatmul.mubr.bf16.gmra.mrb[0].mxu0 %v320
    %v1730 = vpop.f32.mrb[0].mxu0
    %v1731 = vadd.f32 %v1690, %v1730
    %v1732 = vpop.f32.mrb[0].mxu0
    %v1733 = vadd.f32 %v1692, %v1732
    %v1734 = vpop.f32.mrb[0].mxu0
    %v1735 = vpop.f32.mrb[0].mxu0
    %1736 = vdwg.mxu0
    %1737 = vmatprep.subr.bf16.mxu0 %v1197
    %1738 = vmatpush1.bf16.msra.mxu0 %v1196
    %1739 = vmatprep.subr.bf16.mxu0 %v1201
    %1740 = vmatpush1.bf16.msra.mxu0 %v1200
    %1741 = vmatprep.subr.bf16.mxu0 %v1205
    %1742 = vmatpush1.bf16.msra.mxu0 %v1204
    %1743 = vmatprep.subr.bf16.mxu0 %v1209
    %1744 = vmatpush1.bf16.msra.mxu0 %v1208
    %1745 = vmatprep.subr.bf16.mxu0 %v1213
    %1746 = vmatpush1.bf16.msra.mxu0 %v1212
    %1747 = vmatprep.subr.bf16.mxu0 %v1217
    %1748 = vmatpush1.bf16.msra.mxu0 %v1216
    %1749 = vmatprep.subr.bf16.mxu0 %v1221
    %1750 = vmatpush1.bf16.msra.mxu0 %v1220
    %1751 = vmatprep.subr.bf16.mxu0 %v1225
    %1752 = vmatpush1.bf16.msra.mxu0 %v1224
    %1753 = vmatprep.subr.bf16.mxu0 0
    %1754 = vmatpush1.bf16.msra.mxu0 0
    %1755 = vmatprep.subr.bf16.mxu0 0
    %1756 = vmatpush1.bf16.msra.mxu0 0
    %1757 = vmatprep.subr.bf16.mxu0 0
    %1758 = vmatpush1.bf16.msra.mxu0 0
    %1759 = vmatprep.subr.bf16.mxu0 0
    %1760 = vmatpush1.bf16.msra.mxu0 0
    %1761 = vmatprep.subr.bf16.mxu0 0
    %1762 = vmatpush1.bf16.msra.mxu0 0
    %1763 = vmatprep.subr.bf16.mxu0 0
    %1764 = vmatpush1.bf16.msra.mxu0 0
    %1765 = vmatprep.subr.bf16.mxu0 0
    %1766 = vmatpush1.bf16.msra.mxu0 0
    %1767 = vmatprep.subr.bf16.mxu0 0
    %1768 = vmatpush1.bf16.msra.mxu0 0
    %1769 = vmatprep.mubr.bf16.mxu0 0
    %1770 = vmatmul.mubr.bf16.gmra.mrb[0].mxu0 %v322
    %v1771 = vpop.f32.mrb[0].mxu0
    %v1772 = vadd.f32 %v1731, %v1771
    %v1773 = vpop.f32.mrb[0].mxu0
    %v1774 = vadd.f32 %v1733, %v1773
    %v1775 = vpop.f32.mrb[0].mxu0
    %v1776 = vpop.f32.mrb[0].mxu0
    %1777 = vdwg.mxu0
    %v1778 = vtanh.pop %v1608
    %v1779 = vtanh.pop %v1610
    %v1780 = vtanh.pop %v1772
    %v1781 = vtanh.pop %v1774
    %v1782 = vpack.c.bf16 %v1778, %v1778
    %v1783 = vpack.c.bf16 %v1779, %v1779
    %v1784 = vpack.c.bf16 %v1780, %v1780
    %v1785 = vpack.c.bf16 %v1781, %v1781
    %v1786 = vld [vmem:[#allocation4] sm:$0xff]
    %v1787 = vld [vmem:[#allocation4 + $0x8] sm:$0xff]
    %v1788 = vld [vmem:[#allocation4 + $0x10] sm:$0xff]
    %v1789 = vld [vmem:[#allocation4 + $0x18] sm:$0xff]
    %v1790 = vld [vmem:[#allocation4 + $0x20] sm:$0xff]
    %v1791 = vld [vmem:[#allocation4 + $0x28] sm:$0xff]
    %v1792 = vld [vmem:[#allocation4 + $0x30] sm:$0xff]
    %v1793 = vld [vmem:[#allocation4 + $0x38] sm:$0xff]
    %v1794 = vld [vmem:[#allocation4 + $0x40] sm:$0xff]
    %v1795 = vld [vmem:[#allocation4 + $0x48] sm:$0xff]
    %v1796 = vld [vmem:[#allocation4 + $0x50] sm:$0xff]
    %v1797 = vld [vmem:[#allocation4 + $0x58] sm:$0xff]
    %v1798 = vld [vmem:[#allocation4 + $0x60] sm:$0xff]
    %v1799 = vld [vmem:[#allocation4 + $0x68] sm:$0xff]
    %v1800 = vld [vmem:[#allocation4 + $0x70] sm:$0xff]
    %v1801 = vld [vmem:[#allocation4 + $0x78] sm:$0xff]
    %v1802 = vld [vmem:[#allocation4 + $0x80] sm:$0xff]
    %v1803 = vld [vmem:[#allocation4 + $0x88] sm:$0xff]
    %v1804 = vld [vmem:[#allocation4 + $0x90] sm:$0xff]
    %v1805 = vld [vmem:[#allocation4 + $0x98] sm:$0xff]
    %v1806 = vld [vmem:[#allocation4 + $0xa0] sm:$0xff]
    %v1807 = vld [vmem:[#allocation4 + $0xa8] sm:$0xff]
    %v1808 = vld [vmem:[#allocation4 + $0xb0] sm:$0xff]
    %v1809 = vld [vmem:[#allocation4 + $0xb8] sm:$0xff]
    %v1810 = vld [vmem:[#allocation4 + $0xc0] sm:$0xff]
    %v1811 = vld [vmem:[#allocation4 + $0xc8] sm:$0xff]
    %v1812 = vld [vmem:[#allocation4 + $0xd0] sm:$0xff]
    %v1813 = vld [vmem:[#allocation4 + $0xd8] sm:$0xff]
    %v1814 = vld [vmem:[#allocation4 + $0xe0] sm:$0xff]
    %v1815 = vld [vmem:[#allocation4 + $0xe8] sm:$0xff]
    %v1816 = vld [vmem:[#allocation4 + $0xf0] sm:$0xff]
    %v1817 = vld [vmem:[#allocation4 + $0xf8] sm:$0xff]
    %v1818 = vld [vmem:[#allocation4 + $0x100] sm:$0xff]
    %v1819 = vld [vmem:[#allocation4 + $0x108] sm:$0xff]
    %v1820 = vld [vmem:[#allocation4 + $0x110] sm:$0xff]
    %v1821 = vld [vmem:[#allocation4 + $0x118] sm:$0xff]
    %v1822 = vld [vmem:[#allocation4 + $0x120] sm:$0xff]
    %v1823 = vld [vmem:[#allocation4 + $0x128] sm:$0xff]
    %v1824 = vld [vmem:[#allocation4 + $0x130] sm:$0xff]
    %v1825 = vld [vmem:[#allocation4 + $0x138] sm:$0xff]
    %v1826 = vld [vmem:[#allocation4 + $0x140] sm:$0xff]
    %v1827 = vld [vmem:[#allocation4 + $0x148] sm:$0xff]
    %v1828 = vld [vmem:[#allocation4 + $0x150] sm:$0xff]
    %v1829 = vld [vmem:[#allocation4 + $0x158] sm:$0xff]
    %v1830 = vld [vmem:[#allocation4 + $0x160] sm:$0xff]
    %v1831 = vld [vmem:[#allocation4 + $0x168] sm:$0xff]
    %v1832 = vld [vmem:[#allocation4 + $0x170] sm:$0xff]
    %v1833 = vld [vmem:[#allocation4 + $0x178] sm:$0xff]
    %v1834 = vld [vmem:[#allocation4 + $0x180] sm:$0xff]
    %v1835 = vld [vmem:[#allocation4 + $0x188] sm:$0xff]
    %v1836 = vld [vmem:[#allocation4 + $0x190] sm:$0xff]
    %v1837 = vld [vmem:[#allocation4 + $0x198] sm:$0xff]
    %v1838 = vld [vmem:[#allocation4 + $0x1a0] sm:$0xff]
    %v1839 = vld [vmem:[#allocation4 + $0x1a8] sm:$0xff]
    %v1840 = vld [vmem:[#allocation4 + $0x1b0] sm:$0xff]
    %v1841 = vld [vmem:[#allocation4 + $0x1b8] sm:$0xff]
    %v1842 = vld [vmem:[#allocation4 + $0x1c0] sm:$0xff]
    %v1843 = vld [vmem:[#allocation4 + $0x1c8] sm:$0xff]
    %v1844 = vld [vmem:[#allocation4 + $0x1d0] sm:$0xff]
    %v1845 = vld [vmem:[#allocation4 + $0x1d8] sm:$0xff]
    %v1846 = vld [vmem:[#allocation4 + $0x1e0] sm:$0xff]
    %v1847 = vld [vmem:[#allocation4 + $0x1e8] sm:$0xff]
    %v1848 = vld [vmem:[#allocation4 + $0x1f0] sm:$0xff]
    %v1849 = vld [vmem:[#allocation4 + $0x1f8] sm:$0xff]
    %v1850 = vld [vmem:[%s4] sm:$0x3]
    %v1852 = vlaneseq
    %v1853 = vshrl.u32 %v1852, 7
    %v1854 = vsub.s32 0, %v1853
    %v1855 = vrot.slane %v1850, %v1854
    %v1856 = vlaneseq
    %v1857 = vshrl.u32 %v1856, 7
    %v1858 = vsub.s32 1, %v1857
    %v1859 = vrot.slane %v1850, %v1858
    %v1926 = vunpack.c.l.b16 %v1786
    %v1927 = vunpack.c.h.b16 %v1786
    %v1928 = vunpack.c.l.b16 %v1787
    %v1929 = vunpack.c.h.b16 %v1787
    %v1930 = vunpack.c.l.b16 %v1788
    %v1931 = vunpack.c.h.b16 %v1788
    %v1932 = vunpack.c.l.b16 %v1789
    %v1933 = vunpack.c.h.b16 %v1789
    %v1934 = vunpack.c.l.b16 %v1790
    %v1935 = vunpack.c.h.b16 %v1790
    %v1936 = vunpack.c.l.b16 %v1791
    %v1937 = vunpack.c.h.b16 %v1791
    %v1938 = vunpack.c.l.b16 %v1792
    %v1939 = vunpack.c.h.b16 %v1792
    %v1940 = vunpack.c.l.b16 %v1793
    %v1941 = vunpack.c.h.b16 %v1793
    %v1942 = vunpack.c.l.b16 %v1794
    %v1943 = vunpack.c.h.b16 %v1794
    %v1944 = vunpack.c.l.b16 %v1795
    %v1945 = vunpack.c.h.b16 %v1795
    %v1946 = vunpack.c.l.b16 %v1796
    %v1947 = vunpack.c.h.b16 %v1796
    %v1948 = vunpack.c.l.b16 %v1797
    %v1949 = vunpack.c.h.b16 %v1797
    %v1950 = vunpack.c.l.b16 %v1798
    %v1951 = vunpack.c.h.b16 %v1798
    %v1952 = vunpack.c.l.b16 %v1799
    %v1953 = vunpack.c.h.b16 %v1799
    %v1954 = vunpack.c.l.b16 %v1800
    %v1955 = vunpack.c.h.b16 %v1800
    %v1956 = vunpack.c.l.b16 %v1801
    %v1957 = vunpack.c.h.b16 %v1801
    %v1958 = vunpack.c.l.b16 %v1802
    %v1959 = vunpack.c.h.b16 %v1802
    %v1960 = vunpack.c.l.b16 %v1803
    %v1961 = vunpack.c.h.b16 %v1803
    %v1962 = vunpack.c.l.b16 %v1804
    %v1963 = vunpack.c.h.b16 %v1804
    %v1964 = vunpack.c.l.b16 %v1805
    %v1965 = vunpack.c.h.b16 %v1805
    %v1966 = vunpack.c.l.b16 %v1806
    %v1967 = vunpack.c.h.b16 %v1806
    %v1968 = vunpack.c.l.b16 %v1807
    %v1969 = vunpack.c.h.b16 %v1807
    %v1970 = vunpack.c.l.b16 %v1808
    %v1971 = vunpack.c.h.b16 %v1808
    %v1972 = vunpack.c.l.b16 %v1809
    %v1973 = vunpack.c.h.b16 %v1809
    %v1974 = vunpack.c.l.b16 %v1810
    %v1975 = vunpack.c.h.b16 %v1810
    %v1976 = vunpack.c.l.b16 %v1811
    %v1977 = vunpack.c.h.b16 %v1811
    %v1978 = vunpack.c.l.b16 %v1812
    %v1979 = vunpack.c.h.b16 %v1812
    %v1980 = vunpack.c.l.b16 %v1813
    %v1981 = vunpack.c.h.b16 %v1813
    %v1982 = vunpack.c.l.b16 %v1814
    %v1983 = vunpack.c.h.b16 %v1814
    %v1984 = vunpack.c.l.b16 %v1815
    %v1985 = vunpack.c.h.b16 %v1815
    %v1986 = vunpack.c.l.b16 %v1816
    %v1987 = vunpack.c.h.b16 %v1816
    %v1988 = vunpack.c.l.b16 %v1817
    %v1989 = vunpack.c.h.b16 %v1817
    %v1990 = vunpack.c.l.b16 %v1818
    %v1991 = vunpack.c.h.b16 %v1818
    %v1992 = vunpack.c.l.b16 %v1819
    %v1993 = vunpack.c.h.b16 %v1819
    %v1994 = vunpack.c.l.b16 %v1820
    %v1995 = vunpack.c.h.b16 %v1820
    %v1996 = vunpack.c.l.b16 %v1821
    %v1997 = vunpack.c.h.b16 %v1821
    %v1998 = vunpack.c.l.b16 %v1822
    %v1999 = vunpack.c.h.b16 %v1822
    %v2000 = vunpack.c.l.b16 %v1823
    %v2001 = vunpack.c.h.b16 %v1823
    %v2002 = vunpack.c.l.b16 %v1824
    %v2003 = vunpack.c.h.b16 %v1824
    %v2004 = vunpack.c.l.b16 %v1825
    %v2005 = vunpack.c.h.b16 %v1825
    %v2006 = vunpack.c.l.b16 %v1826
    %v2007 = vunpack.c.h.b16 %v1826
    %v2008 = vunpack.c.l.b16 %v1827
    %v2009 = vunpack.c.h.b16 %v1827
    %v2010 = vunpack.c.l.b16 %v1828
    %v2011 = vunpack.c.h.b16 %v1828
    %v2012 = vunpack.c.l.b16 %v1829
    %v2013 = vunpack.c.h.b16 %v1829
    %v2014 = vunpack.c.l.b16 %v1830
    %v2015 = vunpack.c.h.b16 %v1830
    %v2016 = vunpack.c.l.b16 %v1831
    %v2017 = vunpack.c.h.b16 %v1831
    %v2018 = vunpack.c.l.b16 %v1832
    %v2019 = vunpack.c.h.b16 %v1832
    %v2020 = vunpack.c.l.b16 %v1833
    %v2021 = vunpack.c.h.b16 %v1833
    %v2022 = vunpack.c.l.b16 %v1834
    %v2023 = vunpack.c.h.b16 %v1834
    %v2024 = vunpack.c.l.b16 %v1835
    %v2025 = vunpack.c.h.b16 %v1835
    %v2026 = vunpack.c.l.b16 %v1836
    %v2027 = vunpack.c.h.b16 %v1836
    %v2028 = vunpack.c.l.b16 %v1837
    %v2029 = vunpack.c.h.b16 %v1837
    %v2030 = vunpack.c.l.b16 %v1838
    %v2031 = vunpack.c.h.b16 %v1838
    %v2032 = vunpack.c.l.b16 %v1839
    %v2033 = vunpack.c.h.b16 %v1839
    %v2034 = vunpack.c.l.b16 %v1840
    %v2035 = vunpack.c.h.b16 %v1840
    %v2036 = vunpack.c.l.b16 %v1841
    %v2037 = vunpack.c.h.b16 %v1841
    %v2038 = vunpack.c.l.b16 %v1842
    %v2039 = vunpack.c.h.b16 %v1842
    %v2040 = vunpack.c.l.b16 %v1843
    %v2041 = vunpack.c.h.b16 %v1843
    %v2042 = vunpack.c.l.b16 %v1844
    %v2043 = vunpack.c.h.b16 %v1844
    %v2044 = vunpack.c.l.b16 %v1845
    %v2045 = vunpack.c.h.b16 %v1845
    %v2046 = vunpack.c.l.b16 %v1846
    %v2047 = vunpack.c.h.b16 %v1846
    %v2048 = vunpack.c.l.b16 %v1847
    %v2049 = vunpack.c.h.b16 %v1847
    %v2050 = vunpack.c.l.b16 %v1848
    %v2051 = vunpack.c.h.b16 %v1848
    %v2052 = vunpack.c.l.b16 %v1849
    %v2053 = vunpack.c.h.b16 %v1849
    %v2054 = vpack.c.b16 %v1928, %v1926
    %v2055 = vpack.c.b16 %v1929, %v1927
    %v2056 = vpack.c.b16 %v1932, %v1930
    %v2057 = vpack.c.b16 %v1933, %v1931
    %v2058 = vpack.c.b16 %v1936, %v1934
    %v2059 = vpack.c.b16 %v1937, %v1935
    %v2060 = vpack.c.b16 %v1940, %v1938
    %v2061 = vpack.c.b16 %v1941, %v1939
    %v2062 = vpack.c.b16 %v1944, %v1942
    %v2063 = vpack.c.b16 %v1945, %v1943
    %v2064 = vpack.c.b16 %v1948, %v1946
    %v2065 = vpack.c.b16 %v1949, %v1947
    %v2066 = vpack.c.b16 %v1952, %v1950
    %v2067 = vpack.c.b16 %v1953, %v1951
    %v2068 = vpack.c.b16 %v1956, %v1954
    %v2069 = vpack.c.b16 %v1957, %v1955
    %v2070 = vpack.c.b16 %v1960, %v1958
    %v2071 = vpack.c.b16 %v1961, %v1959
    %v2072 = vpack.c.b16 %v1964, %v1962
    %v2073 = vpack.c.b16 %v1965, %v1963
    %v2074 = vpack.c.b16 %v1968, %v1966
    %v2075 = vpack.c.b16 %v1969, %v1967
    %v2076 = vpack.c.b16 %v1972, %v1970
    %v2077 = vpack.c.b16 %v1973, %v1971
    %v2078 = vpack.c.b16 %v1976, %v1974
    %v2079 = vpack.c.b16 %v1977, %v1975
    %v2080 = vpack.c.b16 %v1980, %v1978
    %v2081 = vpack.c.b16 %v1981, %v1979
    %v2082 = vpack.c.b16 %v1984, %v1982
    %v2083 = vpack.c.b16 %v1985, %v1983
    %v2084 = vpack.c.b16 %v1988, %v1986
    %v2085 = vpack.c.b16 %v1989, %v1987
    %v2086 = vpack.c.b16 %v1992, %v1990
    %v2087 = vpack.c.b16 %v1993, %v1991
    %v2088 = vpack.c.b16 %v1996, %v1994
    %v2089 = vpack.c.b16 %v1997, %v1995
    %v2090 = vpack.c.b16 %v2000, %v1998
    %v2091 = vpack.c.b16 %v2001, %v1999
    %v2092 = vpack.c.b16 %v2004, %v2002
    %v2093 = vpack.c.b16 %v2005, %v2003
    %v2094 = vpack.c.b16 %v2008, %v2006
    %v2095 = vpack.c.b16 %v2009, %v2007
    %v2096 = vpack.c.b16 %v2012, %v2010
    %v2097 = vpack.c.b16 %v2013, %v2011
    %v2098 = vpack.c.b16 %v2016, %v2014
    %v2099 = vpack.c.b16 %v2017, %v2015
    %v2100 = vpack.c.b16 %v2020, %v2018
    %v2101 = vpack.c.b16 %v2021, %v2019
    %v2102 = vpack.c.b16 %v2024, %v2022
    %v2103 = vpack.c.b16 %v2025, %v2023
    %v2104 = vpack.c.b16 %v2028, %v2026
    %v2105 = vpack.c.b16 %v2029, %v2027
    %v2106 = vpack.c.b16 %v2032, %v2030
    %v2107 = vpack.c.b16 %v2033, %v2031
    %v2108 = vpack.c.b16 %v2036, %v2034
    %v2109 = vpack.c.b16 %v2037, %v2035
    %v2110 = vpack.c.b16 %v2040, %v2038
    %v2111 = vpack.c.b16 %v2041, %v2039
    %v2112 = vpack.c.b16 %v2044, %v2042
    %v2113 = vpack.c.b16 %v2045, %v2043
    %v2114 = vpack.c.b16 %v2048, %v2046
    %v2115 = vpack.c.b16 %v2049, %v2047
    %v2116 = vpack.c.b16 %v2052, %v2050
    %v2117 = vpack.c.b16 %v2053, %v2051
    %2182 = vmatprep.subr.bf16.mxu0 %v2055
    %2183 = vmatpush1.bf16.msra.mxu0 %v2054
    %2184 = vmatprep.subr.bf16.mxu0 %v2057
    %2185 = vmatpush1.bf16.msra.mxu0 %v2056
    %2186 = vmatprep.subr.bf16.mxu0 %v2059
    %2187 = vmatpush1.bf16.msra.mxu0 %v2058
    %2188 = vmatprep.subr.bf16.mxu0 %v2061
    %2189 = vmatpush1.bf16.msra.mxu0 %v2060
    %2190 = vmatprep.subr.bf16.mxu0 %v2063
    %2191 = vmatpush1.bf16.msra.mxu0 %v2062
    %2192 = vmatprep.subr.bf16.mxu0 %v2065
    %2193 = vmatpush1.bf16.msra.mxu0 %v2064
    %2194 = vmatprep.subr.bf16.mxu0 %v2067
    %2195 = vmatpush1.bf16.msra.mxu0 %v2066
    %2196 = vmatprep.subr.bf16.mxu0 %v2069
    %2197 = vmatpush1.bf16.msra.mxu0 %v2068
    %2198 = vmatprep.subr.bf16.mxu0 %v2071
    %2199 = vmatpush1.bf16.msra.mxu0 %v2070
    %2200 = vmatprep.subr.bf16.mxu0 %v2073
    %2201 = vmatpush1.bf16.msra.mxu0 %v2072
    %2202 = vmatprep.subr.bf16.mxu0 %v2075
    %2203 = vmatpush1.bf16.msra.mxu0 %v2074
    %2204 = vmatprep.subr.bf16.mxu0 %v2077
    %2205 = vmatpush1.bf16.msra.mxu0 %v2076
    %2206 = vmatprep.subr.bf16.mxu0 %v2079
    %2207 = vmatpush1.bf16.msra.mxu0 %v2078
    %2208 = vmatprep.subr.bf16.mxu0 %v2081
    %2209 = vmatpush1.bf16.msra.mxu0 %v2080
    %2210 = vmatprep.subr.bf16.mxu0 %v2083
    %2211 = vmatpush1.bf16.msra.mxu0 %v2082
    %2212 = vmatprep.subr.bf16.mxu0 %v2085
    %2213 = vmatpush1.bf16.msra.mxu0 %v2084
    %2214 = vmatprep.mubr.bf16.mxu0 %v1783
    %2215 = vmatmul.mubr.bf16.gmra.mrb[0].mxu0 %v1782
    %v2216 = vpop.f32.mrb[0].mxu0
    %v2217 = vadd.f32 %v1855, %v2216
    %v2218 = vpop.f32.mrb[0].mxu0
    %v2219 = vadd.f32 %v1859, %v2218
    %v2220 = vpop.f32.mrb[0].mxu0
    %v2221 = vpop.f32.mrb[0].mxu0
    %2222 = vdwg.mxu0
    %2223 = vmatprep.subr.bf16.mxu0 %v2087
    %2224 = vmatpush1.bf16.msra.mxu0 %v2086
    %2225 = vmatprep.subr.bf16.mxu0 %v2089
    %2226 = vmatpush1.bf16.msra.mxu0 %v2088
    %2227 = vmatprep.subr.bf16.mxu0 %v2091
    %2228 = vmatpush1.bf16.msra.mxu0 %v2090
    %2229 = vmatprep.subr.bf16.mxu0 %v2093
    %2230 = vmatpush1.bf16.msra.mxu0 %v2092
    %2231 = vmatprep.subr.bf16.mxu0 %v2095
    %2232 = vmatpush1.bf16.msra.mxu0 %v2094
    %2233 = vmatprep.subr.bf16.mxu0 %v2097
    %2234 = vmatpush1.bf16.msra.mxu0 %v2096
    %2235 = vmatprep.subr.bf16.mxu0 %v2099
    %2236 = vmatpush1.bf16.msra.mxu0 %v2098
    %2237 = vmatprep.subr.bf16.mxu0 %v2101
    %2238 = vmatpush1.bf16.msra.mxu0 %v2100
    %2239 = vmatprep.subr.bf16.mxu0 %v2103
    %2240 = vmatpush1.bf16.msra.mxu0 %v2102
    %2241 = vmatprep.subr.bf16.mxu0 %v2105
    %2242 = vmatpush1.bf16.msra.mxu0 %v2104
    %2243 = vmatprep.subr.bf16.mxu0 %v2107
    %2244 = vmatpush1.bf16.msra.mxu0 %v2106
    %2245 = vmatprep.subr.bf16.mxu0 %v2109
    %2246 = vmatpush1.bf16.msra.mxu0 %v2108
    %2247 = vmatprep.subr.bf16.mxu0 %v2111
    %2248 = vmatpush1.bf16.msra.mxu0 %v2110
    %2249 = vmatprep.subr.bf16.mxu0 %v2113
    %2250 = vmatpush1.bf16.msra.mxu0 %v2112
    %2251 = vmatprep.subr.bf16.mxu0 %v2115
    %2252 = vmatpush1.bf16.msra.mxu0 %v2114
    %2253 = vmatprep.subr.bf16.mxu0 %v2117
    %2254 = vmatpush1.bf16.msra.mxu0 %v2116
    %2255 = vmatprep.mubr.bf16.mxu0 %v1785
    %2256 = vmatmul.mubr.bf16.gmra.mrb[0].mxu0 %v1784
    %v2257 = vpop.f32.mrb[0].mxu0
    %v2258 = vadd.f32 %v2217, %v2257
    %v2259 = vpop.f32.mrb[0].mxu0
    %v2260 = vadd.f32 %v2219, %v2259
    %v2261 = vpop.f32.mrb[0].mxu0
    %v2262 = vpop.f32.mrb[0].mxu0
    %2263 = vdwg.mxu0
    %v2264 = vtanh.pop %v2258
    %v2265 = vtanh.pop %v2260
    %v2266 = vpack.c.bf16 %v2264, %v2264
    %v2267 = vpack.c.bf16 %v2265, %v2265
    %v2268 = vld [vmem:[%s5] sm:$0xf]
    %v2269 = vld [vmem:[%s5 + $0x4] sm:$0xf]
    %v2270 = vld [vmem:[%s5 + $0x8] sm:$0xf]
    %v2271 = vld [vmem:[%s5 + $0xc] sm:$0xf]
    %v2272 = vld [vmem:[%s5 + $0x10] sm:$0xf]
    %v2273 = vld [vmem:[%s5 + $0x14] sm:$0xf]
    %v2274 = vld [vmem:[%s5 + $0x18] sm:$0xf]
    %v2275 = vld [vmem:[%s5 + $0x1c] sm:$0xf]
    %v2276 = vld [vmem:[%s5 + $0x20] sm:$0xf]
    %v2277 = vld [vmem:[%s5 + $0x24] sm:$0xf]
    %v2278 = vld [vmem:[%s5 + $0x28] sm:$0xf]
    %v2279 = vld [vmem:[%s5 + $0x2c] sm:$0xf]
    %v2280 = vld [vmem:[%s5 + $0x30] sm:$0xf]
    %v2281 = vld [vmem:[%s5 + $0x34] sm:$0xf]
    %v2282 = vld [vmem:[%s5 + $0x38] sm:$0xf]
    %v2283 = vld [vmem:[%s5 + $0x3c] sm:$0xf]
    %v2284 = vld [vmem:[%s5 + $0x40] sm:$0xf]
    %v2285 = vld [vmem:[%s5 + $0x44] sm:$0xf]
    %v2286 = vld [vmem:[%s5 + $0x48] sm:$0xf]
    %v2287 = vld [vmem:[%s5 + $0x4c] sm:$0xf]
    %v2288 = vld [vmem:[%s5 + $0x50] sm:$0xf]
    %v2289 = vld [vmem:[%s5 + $0x54] sm:$0xf]
    %v2290 = vld [vmem:[%s5 + $0x58] sm:$0xf]
    %v2291 = vld [vmem:[%s5 + $0x5c] sm:$0xf]
    %v2292 = vld [vmem:[%s5 + $0x60] sm:$0xf]
    %v2293 = vld [vmem:[%s5 + $0x64] sm:$0xf]
    %v2294 = vld [vmem:[%s5 + $0x68] sm:$0xf]
    %v2295 = vld [vmem:[%s5 + $0x6c] sm:$0xf]
    %v2296 = vld [vmem:[%s5 + $0x70] sm:$0xf]
    %v2297 = vld [vmem:[%s5 + $0x74] sm:$0xf]
    %v2298 = vld [vmem:[%s5 + $0x78] sm:$0xf]
    %v2299 = vld [vmem:[%s5 + $0x7c] sm:$0xf]
    %v2300 = vld [vmem:[%s6] sm:$0x1]
    %v2302 = vlaneseq
    %v2303 = vshrl.u32 %v2302, 7
    %v2304 = vsub.s32 0, %v2303
    %v2305 = vrot.slane %v2300, %v2304
    %v2339 = vunpack.c.l.b16 %v2268
    %v2340 = vunpack.c.l.b16 %v2269
    %v2341 = vunpack.c.l.b16 %v2270
    %v2342 = vunpack.c.l.b16 %v2271
    %v2343 = vunpack.c.l.b16 %v2272
    %v2344 = vunpack.c.l.b16 %v2273
    %v2345 = vunpack.c.l.b16 %v2274
    %v2346 = vunpack.c.l.b16 %v2275
    %v2347 = vunpack.c.l.b16 %v2276
    %v2348 = vunpack.c.l.b16 %v2277
    %v2349 = vunpack.c.l.b16 %v2278
    %v2350 = vunpack.c.l.b16 %v2279
    %v2351 = vunpack.c.l.b16 %v2280
    %v2352 = vunpack.c.l.b16 %v2281
    %v2353 = vunpack.c.l.b16 %v2282
    %v2354 = vunpack.c.l.b16 %v2283
    %v2355 = vunpack.c.l.b16 %v2284
    %v2356 = vunpack.c.l.b16 %v2285
    %v2357 = vunpack.c.l.b16 %v2286
    %v2358 = vunpack.c.l.b16 %v2287
    %v2359 = vunpack.c.l.b16 %v2288
    %v2360 = vunpack.c.l.b16 %v2289
    %v2361 = vunpack.c.l.b16 %v2290
    %v2362 = vunpack.c.l.b16 %v2291
    %v2363 = vunpack.c.l.b16 %v2292
    %v2364 = vunpack.c.l.b16 %v2293
    %v2365 = vunpack.c.l.b16 %v2294
    %v2366 = vunpack.c.l.b16 %v2295
    %v2367 = vunpack.c.l.b16 %v2296
    %v2368 = vunpack.c.l.b16 %v2297
    %v2369 = vunpack.c.l.b16 %v2298
    %v2370 = vunpack.c.l.b16 %v2299
    %v2371 = vpack.c.b16 %v2340, %v2339
    %v2372 = vpack.c.b16 %v2342, %v2341
    %v2373 = vpack.c.b16 %v2344, %v2343
    %v2374 = vpack.c.b16 %v2346, %v2345
    %v2375 = vpack.c.b16 %v2348, %v2347
    %v2376 = vpack.c.b16 %v2350, %v2349
    %v2377 = vpack.c.b16 %v2352, %v2351
    %v2378 = vpack.c.b16 %v2354, %v2353
    %v2379 = vpack.c.b16 %v2356, %v2355
    %v2380 = vpack.c.b16 %v2358, %v2357
    %v2381 = vpack.c.b16 %v2360, %v2359
    %v2382 = vpack.c.b16 %v2362, %v2361
    %v2383 = vpack.c.b16 %v2364, %v2363
    %v2384 = vpack.c.b16 %v2366, %v2365
    %v2385 = vpack.c.b16 %v2368, %v2367
    %v2386 = vpack.c.b16 %v2370, %v2369
    %2403 = vmatprep.subr.bf16.mxu0 0
    %2404 = vmatpush1.bf16.msra.mxu0 %v2371
    %2405 = vmatprep.subr.bf16.mxu0 0
    %2406 = vmatpush1.bf16.msra.mxu0 %v2372
    %2407 = vmatprep.subr.bf16.mxu0 0
    %2408 = vmatpush1.bf16.msra.mxu0 %v2373
    %2409 = vmatprep.subr.bf16.mxu0 0
    %2410 = vmatpush1.bf16.msra.mxu0 %v2374
    %2411 = vmatprep.subr.bf16.mxu0 0
    %2412 = vmatpush1.bf16.msra.mxu0 %v2375
    %2413 = vmatprep.subr.bf16.mxu0 0
    %2414 = vmatpush1.bf16.msra.mxu0 %v2376
    %2415 = vmatprep.subr.bf16.mxu0 0
    %2416 = vmatpush1.bf16.msra.mxu0 %v2377
    %2417 = vmatprep.subr.bf16.mxu0 0
    %2418 = vmatpush1.bf16.msra.mxu0 %v2378
    %2419 = vmatprep.subr.bf16.mxu0 0
    %2420 = vmatpush1.bf16.msra.mxu0 %v2379
    %2421 = vmatprep.subr.bf16.mxu0 0
    %2422 = vmatpush1.bf16.msra.mxu0 %v2380
    %2423 = vmatprep.subr.bf16.mxu0 0
    %2424 = vmatpush1.bf16.msra.mxu0 %v2381
    %2425 = vmatprep.subr.bf16.mxu0 0
    %2426 = vmatpush1.bf16.msra.mxu0 %v2382
    %2427 = vmatprep.subr.bf16.mxu0 0
    %2428 = vmatpush1.bf16.msra.mxu0 %v2383
    %2429 = vmatprep.subr.bf16.mxu0 0
    %2430 = vmatpush1.bf16.msra.mxu0 %v2384
    %2431 = vmatprep.subr.bf16.mxu0 0
    %2432 = vmatpush1.bf16.msra.mxu0 %v2385
    %2433 = vmatprep.subr.bf16.mxu0 0
    %2434 = vmatpush1.bf16.msra.mxu0 %v2386
    %2435 = vmatprep.mubr.bf16.mxu0 %v2267
    %2436 = vmatmul.mubr.bf16.gmra.mrb[0].mxu0 %v2266
    %v2437 = vpop.f32.mrb[0].mxu0
    %v2438 = vadd.f32 %v2305, %v2437
    %v2439 = vpop.f32.mrb[0].mxu0
    %v2440 = vpop.f32.mrb[0].mxu0
    %v2441 = vpop.f32.mrb[0].mxu0
    %2442 = vdwg.mxu0
    %2443 = vst [vmem:[%s7] sm:$0xff] %v2438
    // Predicated region
    $region38: #{encoder_forward.1} parent=1 // pred_check
      _
    $region39: #{encoder_forward.1} parent=1 // pred_check_branch
      %2445 = sbr.rel (0) target = $region41
    $region40: #{encoder_forward.1} parent=1 // pred_region
      _
    $region41: #{encoder_forward.1} parent=1 // pred_fallthru
      _
    // Predicated region
    $region42: #{encoder_forward.1} parent=1 // pred_check
      _
    $region43: #{encoder_forward.1} parent=1 // pred_check_branch
      %2447 = sbr.rel (0) target = $region45
    $region44: #{encoder_forward.1} parent=1 // pred_region
      _
    $region45: #{encoder_forward.1} parent=1 // pred_fallthru
      _
    %2448 = vsyncpa [#allocation3], 1
    %2449 = vsyncpa [#allocation5], 1

</llo_original>
